<compile_context>
chip_gen: v7x
topology: tpu7x:2x2x1
jax: 0.10.0
libtpu: 0.0.40
codegen_flags: <defaults>
</compile_context>

<pallas_src>
import jax
import jax.numpy as jnp
from jax.experimental import pallas as pl
from jax.experimental.pallas import tpu as pltpu


def _disc_kernel(xf_ref, l_ref, w0x_ref, w0l_ref, b0_ref, w1_ref, b1_ref,
                 w2_ref, b2_ref, o_ref):
    # Layer 0: mean-pool + concat + Linear(2*in_f, h0), all folded into two
    # MXU matmuls (x half has K = node_num*in_f, lane-dense; l half has K=in_f).
    h = (jnp.dot(xf_ref[...], w0x_ref[...], preferred_element_type=jnp.float32)
         + jnp.dot(l_ref[...], w0l_ref[...], preferred_element_type=jnp.float32)
         + b0_ref[...])
    h = jnp.maximum(h, 0.0)

    # Layer 1: Linear(h0, h1) + ReLU.
    h = jnp.dot(h.astype(w1_ref.dtype), w1_ref[...],
                preferred_element_type=jnp.float32) + b1_ref[...]
    h = jnp.maximum(h, 0.0)

    # Final Linear(h1, 1) + Sigmoid.  Contract W2 [1,h1] against h [bm,h1]
    # (flash-attention style transposed-RHS contraction) so the result lands
    # lane-dense as [1, bm] and the store is a full-width unmasked vst.
    z = jax.lax.dot_general(w2_ref[...], h,
                            dimension_numbers=(((1,), (1,)), ((), ())),
                            preferred_element_type=jnp.float32)
    z = z + b2_ref[...]
    o_ref[...] = pl.reciprocal(1.0 + jnp.exp(-z), approx=True).astype(o_ref.dtype)


def gan_gnn_discriminator_forward(x, l, params, *, block_rows=4096):
    """Discriminator forward.

    x: [node_num, n, in_f] (module layout) or pre-folded [n, node_num*in_f].
    l: [n, in_f].
    Returns sigmoid probabilities of shape [n, 1] (f32).

    Tuning notes: sweep block_rows 4096-8192; on v7x choose it so that
    n // block_rows >= 2 (two TensorCores share the "parallel" grid axis).
    """
    (w0xf, w0l, b0), (w1, b1), (w2, b2) = params

    if x.ndim == 3:
        node_num, n, in_f = x.shape
        # One-time relayout (single extra pass over x in the wrapper): fold the
        # node axis into the lane dim.  Callers that can produce this layout
        # upstream should pass the 2-D slab directly and skip this transpose.
        xf = jnp.transpose(x, (1, 0, 2)).reshape(n, node_num * in_f)
    else:
        xf = x
        n = xf.shape[0]

    k_x = xf.shape[1]
    in_f = l.shape[1]
    assert l.shape[0] == n
    assert w0xf.shape[0] == k_x, "folded W0x rows must equal node_num*in_f"
    assert w0l.shape[0] == in_f

    # Large row tiles amortize the ~0.35us per-grid-step overhead; a small n
    # runs as a single grid step.  Post-fold the per-step buffers are small
    # enough that no vmem_limit bump is needed even at block_rows=8192.
    if n <= block_rows:
        bm = n
    else:
        assert n % block_rows == 0, "pad n to a multiple of block_rows"
        assert block_rows % 128 == 0, "block_rows must be a multiple of 128"
        bm = block_rows
    num_blocks = n // bm

    def rows(i):
        return (i, 0)

    def const(i):
        return (0, 0)

    out = pl.pallas_call(
        _disc_kernel,
        out_shape=jax.ShapeDtypeStruct((num_blocks, bm), jnp.float32),
        grid_spec=pltpu.PrefetchScalarGridSpec(
            num_scalar_prefetch=0,
            grid=(num_blocks,),
            in_specs=[
                pl.BlockSpec((bm, k_x), rows),     # folded x slab, lane-dense
                pl.BlockSpec((bm, in_f), rows),    # l tile
                pl.BlockSpec(w0xf.shape, const),   # folded W0 (x half), resident
                pl.BlockSpec(w0l.shape, const),    # W0 (l half), resident
                pl.BlockSpec(b0.shape, const),
                pl.BlockSpec(w1.shape, const),
                pl.BlockSpec(b1.shape, const),
                pl.BlockSpec(w2.shape, const),     # [1, h1] f32 row
                pl.BlockSpec(b2.shape, const),     # [1, 1]  f32
            ],
            out_specs=pl.BlockSpec((1, bm), rows),  # lane-dense output row
        ),
        compiler_params=pltpu.CompilerParams(
            dimension_semantics=("parallel",),
        ),
    )(xf, l, w0xf, w0l, b0, w1, b1, w2, b2)
    return out.reshape(n, 1)


def init_params(key, node_num, in_f, hidden_fs, *, weight_dtype=jnp.bfloat16):
    """Mirror nn.Linear default init U[-1/sqrt(fan_in), +1/sqrt(fan_in)].

    Returns (kernel_params, ref_params):
      kernel_params: first-layer weight split into (folded x half, l half) with
        the x half pre-tiled over nodes and pre-scaled by 1/node_num (so the
        node mean-pool is absorbed into the matmul); hidden weights stored
        [in, out] in bf16; final layer stored as a f32 [1, h1] row + [1,1] bias.
      ref_params: the unfolded f32 weights, in module layout, for the reference.
    """
    assert len(hidden_fs) == 2, "kernel is written for two hidden layers"
    h0, h1 = hidden_fs

    def linear(k, fan_in, fan_out):
        kw, kb = jax.random.split(k)
        bound = 1.0 / (fan_in ** 0.5)
        w = jax.random.uniform(kw, (fan_in, fan_out), jnp.float32, -bound, bound)
        b = jax.random.uniform(kb, (1, fan_out), jnp.float32, -bound, bound)
        return w, b

    k0, k1, k2 = jax.random.split(key, 3)
    w0, b0 = linear(k0, 2 * in_f, h0)
    w1, b1 = linear(k1, h0, h1)
    w2, b2 = linear(k2, h1, 1)

    w0x, w0l = w0[:in_f], w0[in_f:]
    # Fold mean-pool: row (node*in_f + f) of the folded weight is w0x[f]/node_num,
    # matching the [n, node_num*in_f] (node-major, feature-minor) x slab layout.
    w0x_fold = (jnp.tile(w0x, (node_num, 1)) / float(node_num)).astype(weight_dtype)

    kernel_params = (
        (w0x_fold, w0l.astype(weight_dtype), b0),
        (w1.astype(weight_dtype), b1),
        (w2.T, b2),                     # [1, h1] row, f32; [1, 1] bias, f32
    )
    ref_params = ((w0x, w0l, b0), (w1, b1), (w2, b2))
    return kernel_params, ref_params


def reference_forward(x, l, ref_params, node_num):
    """Pure-JAX reference in the module's own form (pool -> concat -> MLP)."""
    (w0x, w0l, b0), (w1, b1), (w2, b2) = ref_params
    f32 = jnp.float32
    xp = jnp.sum(x.astype(f32), axis=0) / node_num               # mean-pool
    h = jnp.maximum(xp @ w0x + l.astype(f32) @ w0l + b0, 0.0)    # concat folded
    h = jnp.maximum(h @ w1 + b1, 0.0)
    z = h @ w2 + b2
    return 1.0 / (1.0 + jnp.exp(-z))


if __name__ == "__main__":
    node_num = 8
    in_f = 16
    hidden_fs = (32, 64)
    n = 512  # batch of graphs

    key = jax.random.PRNGKey(0)
    kx, kl, kp = jax.random.split(key, 3)

    x = jax.random.normal(kx, (node_num, n, in_f), jnp.float32).astype(jnp.bfloat16)
    l = jax.random.normal(kl, (n, in_f), jnp.float32).astype(jnp.bfloat16)
    kernel_params, ref_params = init_params(kp, node_num, in_f, hidden_fs)

    ref = reference_forward(x, l, ref_params, node_num)

    # Single grid step (n <= default block_rows).
    out_single = jax.block_until_ready(
        gan_gnn_discriminator_forward(x, l, kernel_params))
    # Tiled path: 4 grid steps of 128 rows (exercises the "parallel" axis).
    out_tiled = jax.block_until_ready(
        gan_gnn_discriminator_forward(x, l, kernel_params, block_rows=128))

    for out in (out_single, out_tiled):
        assert out.shape == (n, 1)
        assert bool(jnp.all(out >= 0.0)) and bool(jnp.all(out <= 1.0))
        max_err = float(jnp.max(jnp.abs(out - ref)))
        assert jnp.allclose(out, ref, atol=2e-2, rtol=2e-2), max_err

    print("KERNEL_OK")
</pallas_src>

<mosaic_0001>
module attributes {stable_mosaic.version = 11 : i64} {
  func.func @_disc_kernel(%arg0: i32, %arg1: memref<512x128xbf16, #tpu.memory_space<vmem>>, %arg2: memref<512x16xbf16, #tpu.memory_space<vmem>>, %arg3: memref<128x32xbf16, #tpu.memory_space<vmem>>, %arg4: memref<16x32xbf16, #tpu.memory_space<vmem>>, %arg5: memref<1x32xf32, #tpu.memory_space<vmem>>, %arg6: memref<32x64xbf16, #tpu.memory_space<vmem>>, %arg7: memref<1x64xf32, #tpu.memory_space<vmem>>, %arg8: memref<1x64xf32, #tpu.memory_space<vmem>>, %arg9: memref<1x1xf32, #tpu.memory_space<vmem>>, %arg10: memref<1x512xf32, #tpu.memory_space<vmem>>) attributes {dimension_semantics = [#tpu.dimension_semantics<parallel>], iteration_bounds = array<i64: 1>, scalar_prefetch = 0 : i64, scratch_operands = 0 : i64, tpu.core_type = #tpu.core_type<tc>, window_params = [{transform_indices = @transform_0, window_bounds = array<i64: 512, 128>}, {transform_indices = @transform_1, window_bounds = array<i64: 512, 16>}, {pipeline_mode = #tpu.pipeline_mode<synchronous>, transform_indices = @transform_2, window_bounds = array<i64: 128, 32>}, {pipeline_mode = #tpu.pipeline_mode<synchronous>, transform_indices = @transform_3, window_bounds = array<i64: 16, 32>}, {pipeline_mode = #tpu.pipeline_mode<synchronous>, transform_indices = @transform_4, window_bounds = array<i64: 1, 32>}, {pipeline_mode = #tpu.pipeline_mode<synchronous>, transform_indices = @transform_5, window_bounds = array<i64: 32, 64>}, {pipeline_mode = #tpu.pipeline_mode<synchronous>, transform_indices = @transform_6, window_bounds = array<i64: 1, 64>}, {pipeline_mode = #tpu.pipeline_mode<synchronous>, transform_indices = @transform_7, window_bounds = array<i64: 1, 64>}, {pipeline_mode = #tpu.pipeline_mode<synchronous>, transform_indices = @transform_8, window_bounds = array<i64: 1, 1>}, {transform_indices = @transform_9, window_bounds = array<i64: 1, 512>}]} {
    %c0 = arith.constant 0 : index
    %c0_0 = arith.constant 0 : index
    %0 = vector.load %arg1[%c0, %c0_0] : memref<512x128xbf16, #tpu.memory_space<vmem>>, vector<512x128xbf16>
    %c0_1 = arith.constant 0 : index
    %c0_2 = arith.constant 0 : index
    %1 = vector.load %arg3[%c0_1, %c0_2] : memref<128x32xbf16, #tpu.memory_space<vmem>>, vector<128x32xbf16>
    %cst = arith.constant dense<0.000000e+00> : vector<512x32xf32>
    %2 = tpu.matmul %0, %1, %cst {dimension_numbers = #tpu.dot_dimension_numbers<[1], [0], [0], [1], [0, 0, 1, 1], [], []>} : vector<512x128xbf16>, vector<128x32xbf16>, vector<512x32xf32> -> vector<512x32xf32>
    %c0_3 = arith.constant 0 : index
    %c0_4 = arith.constant 0 : index
    %3 = vector.load %arg2[%c0_3, %c0_4] : memref<512x16xbf16, #tpu.memory_space<vmem>>, vector<512x16xbf16>
    %c0_5 = arith.constant 0 : index
    %c0_6 = arith.constant 0 : index
    %4 = vector.load %arg4[%c0_5, %c0_6] : memref<16x32xbf16, #tpu.memory_space<vmem>>, vector<16x32xbf16>
    %cst_7 = arith.constant dense<0.000000e+00> : vector<512x32xf32>
    %5 = tpu.matmul %3, %4, %cst_7 {dimension_numbers = #tpu.dot_dimension_numbers<[1], [0], [0], [1], [0, 0, 1, 1], [], []>} : vector<512x16xbf16>, vector<16x32xbf16>, vector<512x32xf32> -> vector<512x32xf32>
    %6 = arith.addf %2, %5 : vector<512x32xf32>
    %c0_8 = arith.constant 0 : index
    %c0_9 = arith.constant 0 : index
    %7 = vector.load %arg5[%c0_8, %c0_9] : memref<1x32xf32, #tpu.memory_space<vmem>>, vector<1x32xf32>
    %8 = vector.broadcast %7 : vector<1x32xf32> to vector<512x32xf32>
    %9 = arith.addf %6, %8 : vector<512x32xf32>
    %cst_10 = arith.constant 0.000000e+00 : f32
    %10 = vector.broadcast %cst_10 : f32 to vector<512x32xf32>
    %11 = arith.maximumf %9, %10 : vector<512x32xf32>
    %12 = arith.truncf %11 : vector<512x32xf32> to vector<512x32xbf16>
    %c0_11 = arith.constant 0 : index
    %c0_12 = arith.constant 0 : index
    %13 = vector.load %arg6[%c0_11, %c0_12] : memref<32x64xbf16, #tpu.memory_space<vmem>>, vector<32x64xbf16>
    %cst_13 = arith.constant dense<0.000000e+00> : vector<512x64xf32>
    %14 = tpu.matmul %12, %13, %cst_13 {dimension_numbers = #tpu.dot_dimension_numbers<[1], [0], [0], [1], [0, 0, 1, 1], [], []>} : vector<512x32xbf16>, vector<32x64xbf16>, vector<512x64xf32> -> vector<512x64xf32>
    %c0_14 = arith.constant 0 : index
    %c0_15 = arith.constant 0 : index
    %15 = vector.load %arg7[%c0_14, %c0_15] : memref<1x64xf32, #tpu.memory_space<vmem>>, vector<1x64xf32>
    %16 = vector.broadcast %15 : vector<1x64xf32> to vector<512x64xf32>
    %17 = arith.addf %14, %16 : vector<512x64xf32>
    %cst_16 = arith.constant 0.000000e+00 : f32
    %18 = vector.broadcast %cst_16 : f32 to vector<512x64xf32>
    %19 = arith.maximumf %17, %18 : vector<512x64xf32>
    %c0_17 = arith.constant 0 : index
    %c0_18 = arith.constant 0 : index
    %20 = vector.load %arg8[%c0_17, %c0_18] : memref<1x64xf32, #tpu.memory_space<vmem>>, vector<1x64xf32>
    %cst_19 = arith.constant dense<0.000000e+00> : vector<1x512xf32>
    %21 = tpu.matmul %20, %19, %cst_19 {dimension_numbers = #tpu.dot_dimension_numbers<[1], [1], [0], [0], [0, 0, 1, 0], [], []>} : vector<1x64xf32>, vector<512x64xf32>, vector<1x512xf32> -> vector<1x512xf32>
    %c0_20 = arith.constant 0 : index
    %c0_21 = arith.constant 0 : index
    %22 = vector.load %arg9[%c0_20, %c0_21] : memref<1x1xf32, #tpu.memory_space<vmem>>, vector<1x1xf32>
    %23 = vector.broadcast %22 : vector<1x1xf32> to vector<1x512xf32>
    %24 = arith.addf %21, %23 : vector<1x512xf32>
    %cst_22 = arith.constant 0.000000e+00 : f32
    %25 = vector.broadcast %cst_22 : f32 to vector<1x512xf32>
    %26 = arith.subf %25, %24 : vector<1x512xf32>
    %27 = math.exp %26 : vector<1x512xf32>
    %cst_23 = arith.constant 1.000000e+00 : f32
    %28 = vector.broadcast %cst_23 : f32 to vector<1x512xf32>
    %29 = arith.addf %28, %27 : vector<1x512xf32>
    %30 = tpu.reciprocal %29 {approx = true} : vector<1x512xf32> -> vector<1x512xf32>
    %c0_24 = arith.constant 0 : index
    %c0_25 = arith.constant 0 : index
    %31 = vector.load %arg10[%c0_24, %c0_25] : memref<1x512xf32, #tpu.memory_space<vmem>>, vector<1x512xf32>
    tpu.vector_store %arg10[%c0_24, %c0_25], %30 {strides = array<i32>} : memref<1x512xf32, #tpu.memory_space<vmem>>, vector<1x512xf32>,
    return
  }
  func.func @transform_0(%arg0: i32) -> (i32, i32) {
    %c0_i32 = arith.constant 0 : i32
    %c0_i32_0 = arith.constant 0 : i32
    return %arg0, %c0_i32 : i32, i32
  }
  func.func @transform_1(%arg0: i32) -> (i32, i32) {
    %c0_i32 = arith.constant 0 : i32
    %c0_i32_0 = arith.constant 0 : i32
    return %arg0, %c0_i32 : i32, i32
  }
  func.func @transform_2(%arg0: i32) -> (i32, i32) {
    %c0_i32 = arith.constant 0 : i32
    %c0_i32_0 = arith.constant 0 : i32
    %c0_i32_1 = arith.constant 0 : i32
    return %c0_i32, %c0_i32_0 : i32, i32
  }
  func.func @transform_3(%arg0: i32) -> (i32, i32) {
    %c0_i32 = arith.constant 0 : i32
    %c0_i32_0 = arith.constant 0 : i32
    %c0_i32_1 = arith.constant 0 : i32
    return %c0_i32, %c0_i32_0 : i32, i32
  }
  func.func @transform_4(%arg0: i32) -> (i32, i32) {
    %c0_i32 = arith.constant 0 : i32
    %c0_i32_0 = arith.constant 0 : i32
    %c0_i32_1 = arith.constant 0 : i32
    return %c0_i32, %c0_i32_0 : i32, i32
  }
  func.func @transform_5(%arg0: i32) -> (i32, i32) {
    %c0_i32 = arith.constant 0 : i32
    %c0_i32_0 = arith.constant 0 : i32
    %c0_i32_1 = arith.constant 0 : i32
    return %c0_i32, %c0_i32_0 : i32, i32
  }
  func.func @transform_6(%arg0: i32) -> (i32, i32) {
    %c0_i32 = arith.constant 0 : i32
    %c0_i32_0 = arith.constant 0 : i32
    %c0_i32_1 = arith.constant 0 : i32
    return %c0_i32, %c0_i32_0 : i32, i32
  }
  func.func @transform_7(%arg0: i32) -> (i32, i32) {
    %c0_i32 = arith.constant 0 : i32
    %c0_i32_0 = arith.constant 0 : i32
    %c0_i32_1 = arith.constant 0 : i32
    return %c0_i32, %c0_i32_0 : i32, i32
  }
  func.func @transform_8(%arg0: i32) -> (i32, i32) {
    %c0_i32 = arith.constant 0 : i32
    %c0_i32_0 = arith.constant 0 : i32
    %c0_i32_1 = arith.constant 0 : i32
    return %c0_i32, %c0_i32_0 : i32, i32
  }
  func.func @transform_9(%arg0: i32) -> (i32, i32) {
    %c0_i32 = arith.constant 0 : i32
    %c0_i32_0 = arith.constant 0 : i32
    return %arg0, %c0_i32 : i32, i32
  }
}

</mosaic_0001>

<llo_original>
// kernel: tpu_custom_call.1
$region0: #{tpu_custom_call.1}
  #allocation0 [shape = 'u32[]', space=smem, size = 0x4, offset = 0x4, fixed_abs, tag = 'smem constant byte address 0x4 - core index']
  #allocation1 [shape = 'u32[144,128]{1,0:T(1,128)}', space=vmem, size = 0x12000, scoped, tag = 'internal scratch']
  #allocation2 [shape = 'f32[1,1]{1,0:T(1,128)S(1)}', space=vmem, size = 0x200, scoped, tag = 'scoped memory for tpu_custom_call.1']
  %s0 = inlined_call_operand.vmem [shape: bf16[512,128], index: 0, kind: input, shape index: {}]
  %s1 = inlined_call_operand.vmem [shape: bf16[512,16], index: 1, kind: input, shape index: {}]
  %s2 = inlined_call_operand.vmem [shape: bf16[128,32], index: 2, kind: input, shape index: {}]
  %s3 = inlined_call_operand.vmem [shape: bf16[16,32], index: 3, kind: input, shape index: {}]
  %s4 = inlined_call_operand.vmem [shape: f32[1,32], index: 4, kind: input, shape index: {}]
  %s5 = inlined_call_operand.vmem [shape: bf16[32,64], index: 5, kind: input, shape index: {}]
  %s6 = inlined_call_operand.vmem [shape: f32[1,64], index: 6, kind: input, shape index: {}]
  %s7 = inlined_call_operand.vmem [shape: f32[1,64], index: 7, kind: input, shape index: {}]
  %s8 = inlined_call_operand.<no memory space> [shape: f32[1,1], index: 8, kind: input, shape index: {}]
  %s9 = inlined_call_operand.hbm [shape: f32[1,512], index: 9, kind: output, shape index: {}]
  %s10 = sld [smem:[#allocation0]]
  $region46: #{tpu_custom_call.1} parent=0
    _
  %s12 = ssub.s32 1, %s10
  %s13 = scalar_select 0, %s12, %s10
  %v14 = vstv %s8
  %15 = vst [vmem:[#allocation2] sm:$0x1] %v14
  $region1: #{tpu_custom_call.1} parent=0
    #allocation3 [shape = 'u8[2048]{0}', space=vmem, size = 0x800, scoped, tag = 'output window, operand 0, single buffered']
    #allocation4 [shape = 's32[1]{0}', space=sflag, size = 0x4, scoped, tag = 'scoped memory for tpu_custom_call.1']
    %16 = vsyncpa [#allocation4], 0
    // Predicated region
    $region2: #{tpu_custom_call.1} parent=1 // pred_check
      _
    $region3: #{tpu_custom_call.1} parent=1 // pred_check_branch
      %18 = sbr.rel (0) target = $region5
    $region4: #{tpu_custom_call.1} parent=1 // pred_region
      _
    $region5: #{tpu_custom_call.1} parent=1 // pred_fallthru
      _
    // Predicated region
    $region6: #{tpu_custom_call.1} parent=1 // pred_check
      _
    $region7: #{tpu_custom_call.1} parent=1 // pred_check_branch
      %20 = sbr.rel (0) target = $region9
    $region8: #{tpu_custom_call.1} parent=1 // pred_region
      _
    $region9: #{tpu_custom_call.1} parent=1 // pred_fallthru
      _
    // Predicated region
    $region10: #{tpu_custom_call.1} parent=1 // pred_check
      _
    $region11: #{tpu_custom_call.1} parent=1 // pred_check_branch
      %22 = sbr.rel (0) target = $region13
    $region12: #{tpu_custom_call.1} parent=1 // pred_region
      _
    $region13: #{tpu_custom_call.1} parent=1 // pred_fallthru
      _
    // Predicated region
    $region14: #{tpu_custom_call.1} parent=1 // pred_check
      _
    $region15: #{tpu_custom_call.1} parent=1 // pred_check_branch
      %24 = sbr.rel (0) target = $region17
    $region16: #{tpu_custom_call.1} parent=1 // pred_region
      _
    $region17: #{tpu_custom_call.1} parent=1 // pred_fallthru
      _
    // Predicated region
    $region18: #{tpu_custom_call.1} parent=1 // pred_check
      _
    $region19: #{tpu_custom_call.1} parent=1 // pred_check_branch
      %26 = sbr.rel (0) target = $region21
    $region20: #{tpu_custom_call.1} parent=1 // pred_region
      _
    $region21: #{tpu_custom_call.1} parent=1 // pred_fallthru
      _
    // Predicated region
    $region22: #{tpu_custom_call.1} parent=1 // pred_check
      _
    $region23: #{tpu_custom_call.1} parent=1 // pred_check_branch
      %28 = sbr.rel (0) target = $region25
    $region24: #{tpu_custom_call.1} parent=1 // pred_region
      _
    $region25: #{tpu_custom_call.1} parent=1 // pred_fallthru
      _
    // Predicated region
    $region26: #{tpu_custom_call.1} parent=1 // pred_check
      _
    $region27: #{tpu_custom_call.1} parent=1 // pred_check_branch
      %30 = sbr.rel (0) target = $region29
    $region28: #{tpu_custom_call.1} parent=1 // pred_region
      _
    $region29: #{tpu_custom_call.1} parent=1 // pred_fallthru
      _
    // Predicated region
    $region30: #{tpu_custom_call.1} parent=1 // pred_check
      _
    $region31: #{tpu_custom_call.1} parent=1 // pred_check_branch
      %32 = sbr.rel (0) target = $region33
    $region32: #{tpu_custom_call.1} parent=1 // pred_region
      _
    $region33: #{tpu_custom_call.1} parent=1 // pred_fallthru
      _
    // Predicated region
    $region34: #{tpu_custom_call.1} parent=1 // pred_check
      _
    $region35: #{tpu_custom_call.1} parent=1 // pred_check_branch
      %34 = sbr.rel (0) target = $region37
    $region36: #{tpu_custom_call.1} parent=1 // pred_region
      _
    $region37: #{tpu_custom_call.1} parent=1 // pred_fallthru
      _
    %v36 = vld [vmem:[%s0] sm:$0xf]
    %v37 = vld [vmem:[%s0 + $0x4] sm:$0xf]
    %v38 = vld [vmem:[%s0 + $0x8] sm:$0xf]
    %v39 = vld [vmem:[%s0 + $0xc] sm:$0xf]
    %v40 = vld [vmem:[%s0 + $0x10] sm:$0xf]
    %v41 = vld [vmem:[%s0 + $0x14] sm:$0xf]
    %v42 = vld [vmem:[%s0 + $0x18] sm:$0xf]
    %v43 = vld [vmem:[%s0 + $0x1c] sm:$0xf]
    %v44 = vld [vmem:[%s0 + $0x20] sm:$0xf]
    %v45 = vld [vmem:[%s0 + $0x24] sm:$0xf]
    %v46 = vld [vmem:[%s0 + $0x28] sm:$0xf]
    %v47 = vld [vmem:[%s0 + $0x2c] sm:$0xf]
    %v48 = vld [vmem:[%s0 + $0x30] sm:$0xf]
    %v49 = vld [vmem:[%s0 + $0x34] sm:$0xf]
    %v50 = vld [vmem:[%s0 + $0x38] sm:$0xf]
    %v51 = vld [vmem:[%s0 + $0x3c] sm:$0xf]
    %v52 = vld [vmem:[%s0 + $0x40] sm:$0xf]
    %v53 = vld [vmem:[%s0 + $0x44] sm:$0xf]
    %v54 = vld [vmem:[%s0 + $0x48] sm:$0xf]
    %v55 = vld [vmem:[%s0 + $0x4c] sm:$0xf]
    %v56 = vld [vmem:[%s0 + $0x50] sm:$0xf]
    %v57 = vld [vmem:[%s0 + $0x54] sm:$0xf]
    %v58 = vld [vmem:[%s0 + $0x58] sm:$0xf]
    %v59 = vld [vmem:[%s0 + $0x5c] sm:$0xf]
    %v60 = vld [vmem:[%s0 + $0x60] sm:$0xf]
    %v61 = vld [vmem:[%s0 + $0x64] sm:$0xf]
    %v62 = vld [vmem:[%s0 + $0x68] sm:$0xf]
    %v63 = vld [vmem:[%s0 + $0x6c] sm:$0xf]
    %v64 = vld [vmem:[%s0 + $0x70] sm:$0xf]
    %v65 = vld [vmem:[%s0 + $0x74] sm:$0xf]
    %v66 = vld [vmem:[%s0 + $0x78] sm:$0xf]
    %v67 = vld [vmem:[%s0 + $0x7c] sm:$0xf]
    %v68 = vld [vmem:[%s0 + $0x80] sm:$0xf]
    %v69 = vld [vmem:[%s0 + $0x84] sm:$0xf]
    %v70 = vld [vmem:[%s0 + $0x88] sm:$0xf]
    %v71 = vld [vmem:[%s0 + $0x8c] sm:$0xf]
    %v72 = vld [vmem:[%s0 + $0x90] sm:$0xf]
    %v73 = vld [vmem:[%s0 + $0x94] sm:$0xf]
    %v74 = vld [vmem:[%s0 + $0x98] sm:$0xf]
    %v75 = vld [vmem:[%s0 + $0x9c] sm:$0xf]
    %v76 = vld [vmem:[%s0 + $0xa0] sm:$0xf]
    %v77 = vld [vmem:[%s0 + $0xa4] sm:$0xf]
    %v78 = vld [vmem:[%s0 + $0xa8] sm:$0xf]
    %v79 = vld [vmem:[%s0 + $0xac] sm:$0xf]
    %v80 = vld [vmem:[%s0 + $0xb0] sm:$0xf]
    %v81 = vld [vmem:[%s0 + $0xb4] sm:$0xf]
    %v82 = vld [vmem:[%s0 + $0xb8] sm:$0xf]
    %v83 = vld [vmem:[%s0 + $0xbc] sm:$0xf]
    %v84 = vld [vmem:[%s0 + $0xc0] sm:$0xf]
    %v85 = vld [vmem:[%s0 + $0xc4] sm:$0xf]
    %v86 = vld [vmem:[%s0 + $0xc8] sm:$0xf]
    %v87 = vld [vmem:[%s0 + $0xcc] sm:$0xf]
    %v88 = vld [vmem:[%s0 + $0xd0] sm:$0xf]
    %v89 = vld [vmem:[%s0 + $0xd4] sm:$0xf]
    %v90 = vld [vmem:[%s0 + $0xd8] sm:$0xf]
    %v91 = vld [vmem:[%s0 + $0xdc] sm:$0xf]
    %v92 = vld [vmem:[%s0 + $0xe0] sm:$0xf]
    %v93 = vld [vmem:[%s0 + $0xe4] sm:$0xf]
    %v94 = vld [vmem:[%s0 + $0xe8] sm:$0xf]
    %v95 = vld [vmem:[%s0 + $0xec] sm:$0xf]
    %v96 = vld [vmem:[%s0 + $0xf0] sm:$0xf]
    %v97 = vld [vmem:[%s0 + $0xf4] sm:$0xf]
    %v98 = vld [vmem:[%s0 + $0xf8] sm:$0xf]
    %v99 = vld [vmem:[%s0 + $0xfc] sm:$0xf]
    %v100 = vld [vmem:[%s2] sm:$0xf]
    %v101 = vld [vmem:[%s2 + $0x4] sm:$0xf]
    %v102 = vld [vmem:[%s2 + $0x8] sm:$0xf]
    %v103 = vld [vmem:[%s2 + $0xc] sm:$0xf]
    %v104 = vld [vmem:[%s2 + $0x10] sm:$0xf]
    %v105 = vld [vmem:[%s2 + $0x14] sm:$0xf]
    %v106 = vld [vmem:[%s2 + $0x18] sm:$0xf]
    %v107 = vld [vmem:[%s2 + $0x1c] sm:$0xf]
    %v108 = vld [vmem:[%s2 + $0x20] sm:$0xf]
    %v109 = vld [vmem:[%s2 + $0x24] sm:$0xf]
    %v110 = vld [vmem:[%s2 + $0x28] sm:$0xf]
    %v111 = vld [vmem:[%s2 + $0x2c] sm:$0xf]
    %v112 = vld [vmem:[%s2 + $0x30] sm:$0xf]
    %v113 = vld [vmem:[%s2 + $0x34] sm:$0xf]
    %v114 = vld [vmem:[%s2 + $0x38] sm:$0xf]
    %v115 = vld [vmem:[%s2 + $0x3c] sm:$0xf]
    %v116 = vld [vmem:[%s1] sm:$0xf]
    %v117 = vld [vmem:[%s1 + $0x4] sm:$0xf]
    %v118 = vld [vmem:[%s1 + $0x8] sm:$0xf]
    %v119 = vld [vmem:[%s1 + $0xc] sm:$0xf]
    %v120 = vld [vmem:[%s1 + $0x10] sm:$0xf]
    %v121 = vld [vmem:[%s1 + $0x14] sm:$0xf]
    %v122 = vld [vmem:[%s1 + $0x18] sm:$0xf]
    %v123 = vld [vmem:[%s1 + $0x1c] sm:$0xf]
    %v124 = vld [vmem:[%s1 + $0x20] sm:$0xf]
    %v125 = vld [vmem:[%s1 + $0x24] sm:$0xf]
    %v126 = vld [vmem:[%s1 + $0x28] sm:$0xf]
    %v127 = vld [vmem:[%s1 + $0x2c] sm:$0xf]
    %v128 = vld [vmem:[%s1 + $0x30] sm:$0xf]
    %v129 = vld [vmem:[%s1 + $0x34] sm:$0xf]
    %v130 = vld [vmem:[%s1 + $0x38] sm:$0xf]
    %v131 = vld [vmem:[%s1 + $0x3c] sm:$0xf]
    %v132 = vld [vmem:[%s1 + $0x40] sm:$0xf]
    %v133 = vld [vmem:[%s1 + $0x44] sm:$0xf]
    %v134 = vld [vmem:[%s1 + $0x48] sm:$0xf]
    %v135 = vld [vmem:[%s1 + $0x4c] sm:$0xf]
    %v136 = vld [vmem:[%s1 + $0x50] sm:$0xf]
    %v137 = vld [vmem:[%s1 + $0x54] sm:$0xf]
    %v138 = vld [vmem:[%s1 + $0x58] sm:$0xf]
    %v139 = vld [vmem:[%s1 + $0x5c] sm:$0xf]
    %v140 = vld [vmem:[%s1 + $0x60] sm:$0xf]
    %v141 = vld [vmem:[%s1 + $0x64] sm:$0xf]
    %v142 = vld [vmem:[%s1 + $0x68] sm:$0xf]
    %v143 = vld [vmem:[%s1 + $0x6c] sm:$0xf]
    %v144 = vld [vmem:[%s1 + $0x70] sm:$0xf]
    %v145 = vld [vmem:[%s1 + $0x74] sm:$0xf]
    %v146 = vld [vmem:[%s1 + $0x78] sm:$0xf]
    %v147 = vld [vmem:[%s1 + $0x7c] sm:$0xf]
    %v148 = vld [vmem:[%s1 + $0x80] sm:$0xf]
    %v149 = vld [vmem:[%s1 + $0x84] sm:$0xf]
    %v150 = vld [vmem:[%s1 + $0x88] sm:$0xf]
    %v151 = vld [vmem:[%s1 + $0x8c] sm:$0xf]
    %v152 = vld [vmem:[%s1 + $0x90] sm:$0xf]
    %v153 = vld [vmem:[%s1 + $0x94] sm:$0xf]
    %v154 = vld [vmem:[%s1 + $0x98] sm:$0xf]
    %v155 = vld [vmem:[%s1 + $0x9c] sm:$0xf]
    %v156 = vld [vmem:[%s1 + $0xa0] sm:$0xf]
    %v157 = vld [vmem:[%s1 + $0xa4] sm:$0xf]
    %v158 = vld [vmem:[%s1 + $0xa8] sm:$0xf]
    %v159 = vld [vmem:[%s1 + $0xac] sm:$0xf]
    %v160 = vld [vmem:[%s1 + $0xb0] sm:$0xf]
    %v161 = vld [vmem:[%s1 + $0xb4] sm:$0xf]
    %v162 = vld [vmem:[%s1 + $0xb8] sm:$0xf]
    %v163 = vld [vmem:[%s1 + $0xbc] sm:$0xf]
    %v164 = vld [vmem:[%s1 + $0xc0] sm:$0xf]
    %v165 = vld [vmem:[%s1 + $0xc4] sm:$0xf]
    %v166 = vld [vmem:[%s1 + $0xc8] sm:$0xf]
    %v167 = vld [vmem:[%s1 + $0xcc] sm:$0xf]
    %v168 = vld [vmem:[%s1 + $0xd0] sm:$0xf]
    %v169 = vld [vmem:[%s1 + $0xd4] sm:$0xf]
    %v170 = vld [vmem:[%s1 + $0xd8] sm:$0xf]
    %v171 = vld [vmem:[%s1 + $0xdc] sm:$0xf]
    %v172 = vld [vmem:[%s1 + $0xe0] sm:$0xf]
    %v173 = vld [vmem:[%s1 + $0xe4] sm:$0xf]
    %v174 = vld [vmem:[%s1 + $0xe8] sm:$0xf]
    %v175 = vld [vmem:[%s1 + $0xec] sm:$0xf]
    %v176 = vld [vmem:[%s1 + $0xf0] sm:$0xf]
    %v177 = vld [vmem:[%s1 + $0xf4] sm:$0xf]
    %v178 = vld [vmem:[%s1 + $0xf8] sm:$0xf]
    %v179 = vld [vmem:[%s1 + $0xfc] sm:$0xf]
    %v180 = vld [vmem:[%s3] sm:$0xf]
    %v181 = vld [vmem:[%s3 + $0x4] sm:$0xf]
    %v246 = vunpack.c.l.b16 %v116
    %v247 = vunpack.c.l.b16 %v117
    %v248 = vunpack.c.l.b16 %v118
    %v249 = vunpack.c.l.b16 %v119
    %v250 = vunpack.c.l.b16 %v120
    %v251 = vunpack.c.l.b16 %v121
    %v252 = vunpack.c.l.b16 %v122
    %v253 = vunpack.c.l.b16 %v123
    %v254 = vunpack.c.l.b16 %v124
    %v255 = vunpack.c.l.b16 %v125
    %v256 = vunpack.c.l.b16 %v126
    %v257 = vunpack.c.l.b16 %v127
    %v258 = vunpack.c.l.b16 %v128
    %v259 = vunpack.c.l.b16 %v129
    %v260 = vunpack.c.l.b16 %v130
    %v261 = vunpack.c.l.b16 %v131
    %v262 = vunpack.c.l.b16 %v132
    %v263 = vunpack.c.l.b16 %v133
    %v264 = vunpack.c.l.b16 %v134
    %v265 = vunpack.c.l.b16 %v135
    %v266 = vunpack.c.l.b16 %v136
    %v267 = vunpack.c.l.b16 %v137
    %v268 = vunpack.c.l.b16 %v138
    %v269 = vunpack.c.l.b16 %v139
    %v270 = vunpack.c.l.b16 %v140
    %v271 = vunpack.c.l.b16 %v141
    %v272 = vunpack.c.l.b16 %v142
    %v273 = vunpack.c.l.b16 %v143
    %v274 = vunpack.c.l.b16 %v144
    %v275 = vunpack.c.l.b16 %v145
    %v276 = vunpack.c.l.b16 %v146
    %v277 = vunpack.c.l.b16 %v147
    %v278 = vunpack.c.l.b16 %v148
    %v279 = vunpack.c.l.b16 %v149
    %v280 = vunpack.c.l.b16 %v150
    %v281 = vunpack.c.l.b16 %v151
    %v282 = vunpack.c.l.b16 %v152
    %v283 = vunpack.c.l.b16 %v153
    %v284 = vunpack.c.l.b16 %v154
    %v285 = vunpack.c.l.b16 %v155
    %v286 = vunpack.c.l.b16 %v156
    %v287 = vunpack.c.l.b16 %v157
    %v288 = vunpack.c.l.b16 %v158
    %v289 = vunpack.c.l.b16 %v159
    %v290 = vunpack.c.l.b16 %v160
    %v291 = vunpack.c.l.b16 %v161
    %v292 = vunpack.c.l.b16 %v162
    %v293 = vunpack.c.l.b16 %v163
    %v294 = vunpack.c.l.b16 %v164
    %v295 = vunpack.c.l.b16 %v165
    %v296 = vunpack.c.l.b16 %v166
    %v297 = vunpack.c.l.b16 %v167
    %v298 = vunpack.c.l.b16 %v168
    %v299 = vunpack.c.l.b16 %v169
    %v300 = vunpack.c.l.b16 %v170
    %v301 = vunpack.c.l.b16 %v171
    %v302 = vunpack.c.l.b16 %v172
    %v303 = vunpack.c.l.b16 %v173
    %v304 = vunpack.c.l.b16 %v174
    %v305 = vunpack.c.l.b16 %v175
    %v306 = vunpack.c.l.b16 %v176
    %v307 = vunpack.c.l.b16 %v177
    %v308 = vunpack.c.l.b16 %v178
    %v309 = vunpack.c.l.b16 %v179
    %v310 = vpack.c.b16 %v247, %v246
    %v311 = vpack.c.b16 %v249, %v248
    %v312 = vpack.c.b16 %v251, %v250
    %v313 = vpack.c.b16 %v253, %v252
    %v314 = vpack.c.b16 %v255, %v254
    %v315 = vpack.c.b16 %v257, %v256
    %v316 = vpack.c.b16 %v259, %v258
    %v317 = vpack.c.b16 %v261, %v260
    %v318 = vpack.c.b16 %v263, %v262
    %v319 = vpack.c.b16 %v265, %v264
    %v320 = vpack.c.b16 %v267, %v266
    %v321 = vpack.c.b16 %v269, %v268
    %v322 = vpack.c.b16 %v271, %v270
    %v323 = vpack.c.b16 %v273, %v272
    %v324 = vpack.c.b16 %v275, %v274
    %v325 = vpack.c.b16 %v277, %v276
    %v326 = vpack.c.b16 %v279, %v278
    %v327 = vpack.c.b16 %v281, %v280
    %v328 = vpack.c.b16 %v283, %v282
    %v329 = vpack.c.b16 %v285, %v284
    %v330 = vpack.c.b16 %v287, %v286
    %v331 = vpack.c.b16 %v289, %v288
    %v332 = vpack.c.b16 %v291, %v290
    %v333 = vpack.c.b16 %v293, %v292
    %v334 = vpack.c.b16 %v295, %v294
    %v335 = vpack.c.b16 %v297, %v296
    %v336 = vpack.c.b16 %v299, %v298
    %v337 = vpack.c.b16 %v301, %v300
    %v338 = vpack.c.b16 %v303, %v302
    %v339 = vpack.c.b16 %v305, %v304
    %v340 = vpack.c.b16 %v307, %v306
    %v341 = vpack.c.b16 %v309, %v308
    %v344 = vunpack.c.l.b16 %v180
    %v345 = vunpack.c.l.b16 %v181
    %v346 = vpack.c.b16 %v345, %v344
    %vm348 = vcmask 130048
    %v350 = vsel %vm348, %v310, 0
    %v353 = vsel %vm348, %v311, 0
    %v356 = vsel %vm348, %v312, 0
    %v359 = vsel %vm348, %v313, 0
    %v362 = vsel %vm348, %v314, 0
    %v365 = vsel %vm348, %v315, 0
    %v368 = vsel %vm348, %v316, 0
    %v371 = vsel %vm348, %v317, 0
    %v374 = vsel %vm348, %v318, 0
    %v377 = vsel %vm348, %v319, 0
    %v380 = vsel %vm348, %v320, 0
    %v383 = vsel %vm348, %v321, 0
    %v386 = vsel %vm348, %v322, 0
    %v389 = vsel %vm348, %v323, 0
    %v392 = vsel %vm348, %v324, 0
    %v395 = vsel %vm348, %v325, 0
    %v398 = vsel %vm348, %v326, 0
    %v401 = vsel %vm348, %v327, 0
    %v404 = vsel %vm348, %v328, 0
    %v407 = vsel %vm348, %v329, 0
    %v410 = vsel %vm348, %v330, 0
    %v413 = vsel %vm348, %v331, 0
    %v416 = vsel %vm348, %v332, 0
    %v419 = vsel %vm348, %v333, 0
    %v422 = vsel %vm348, %v334, 0
    %v425 = vsel %vm348, %v335, 0
    %v428 = vsel %vm348, %v336, 0
    %v431 = vsel %vm348, %v337, 0
    %v434 = vsel %vm348, %v338, 0
    %v437 = vsel %vm348, %v339, 0
    %v440 = vsel %vm348, %v340, 0
    %v443 = vsel %vm348, %v341, 0
    %445 = vmatprep.subr.bf16.mxu0 0
    %446 = vmatpush1.bf16.msra.mxu0 %v346
    %447 = vmatprep.subr.bf16.mxu0 0
    %448 = vmatpush1.bf16.msra.mxu0 0
    %449 = vmatprep.subr.bf16.mxu0 0
    %450 = vmatpush1.bf16.msra.mxu0 0
    %451 = vmatprep.subr.bf16.mxu0 0
    %452 = vmatpush1.bf16.msra.mxu0 0
    %453 = vmatprep.subr.bf16.mxu0 0
    %454 = vmatpush1.bf16.msra.mxu0 0
    %455 = vmatprep.subr.bf16.mxu0 0
    %456 = vmatpush1.bf16.msra.mxu0 0
    %457 = vmatprep.subr.bf16.mxu0 0
    %458 = vmatpush1.bf16.msra.mxu0 0
    %459 = vmatprep.subr.bf16.mxu0 0
    %460 = vmatpush1.bf16.msra.mxu0 0
    %461 = vmatprep.subr.bf16.mxu0 0
    %462 = vmatpush1.bf16.msra.mxu0 0
    %463 = vmatprep.subr.bf16.mxu0 0
    %464 = vmatpush1.bf16.msra.mxu0 0
    %465 = vmatprep.subr.bf16.mxu0 0
    %466 = vmatpush1.bf16.msra.mxu0 0
    %467 = vmatprep.subr.bf16.mxu0 0
    %468 = vmatpush1.bf16.msra.mxu0 0
    %469 = vmatprep.subr.bf16.mxu0 0
    %470 = vmatpush1.bf16.msra.mxu0 0
    %471 = vmatprep.subr.bf16.mxu0 0
    %472 = vmatpush1.bf16.msra.mxu0 0
    %473 = vmatprep.subr.bf16.mxu0 0
    %474 = vmatpush1.bf16.msra.mxu0 0
    %475 = vmatprep.subr.bf16.mxu0 0
    %476 = vmatpush1.bf16.msra.mxu0 0
    %477 = vmatprep.mubr.bf16.mxu0 0
    %478 = vmatmul.mubr.bf16.gmra.mrb[0].mxu0 %v350
    %v479 = vpop.f32.mrb[0].mxu0
    %v480 = vadd.f32 0.0, %v479
    %v481 = vpop.f32.mrb[0].mxu0
    %v482 = vpop.f32.mrb[0].mxu0
    %v483 = vadd.f32 0.0, %v482
    %v484 = vpop.f32.mrb[0].mxu0
    %485 = vmatprep.mubr.bf16.mxu0 0
    %486 = vmatmul.mubr.bf16.gmra.mrb[0].mxu0 %v353
    %v487 = vpop.f32.mrb[0].mxu0
    %v488 = vadd.f32 0.0, %v487
    %v489 = vpop.f32.mrb[0].mxu0
    %v490 = vpop.f32.mrb[0].mxu0
    %v491 = vadd.f32 0.0, %v490
    %v492 = vpop.f32.mrb[0].mxu0
    %493 = vmatprep.mubr.bf16.mxu0 0
    %494 = vmatmul.mubr.bf16.gmra.mrb[0].mxu0 %v356
    %v495 = vpop.f32.mrb[0].mxu0
    %v496 = vadd.f32 0.0, %v495
    %v497 = vpop.f32.mrb[0].mxu0
    %v498 = vpop.f32.mrb[0].mxu0
    %v499 = vadd.f32 0.0, %v498
    %v500 = vpop.f32.mrb[0].mxu0
    %501 = vmatprep.mubr.bf16.mxu0 0
    %502 = vmatmul.mubr.bf16.gmra.mrb[0].mxu0 %v359
    %v503 = vpop.f32.mrb[0].mxu0
    %v504 = vadd.f32 0.0, %v503
    %v505 = vpop.f32.mrb[0].mxu0
    %v506 = vpop.f32.mrb[0].mxu0
    %v507 = vadd.f32 0.0, %v506
    %v508 = vpop.f32.mrb[0].mxu0
    %509 = vmatprep.mubr.bf16.mxu0 0
    %510 = vmatmul.mubr.bf16.gmra.mrb[0].mxu0 %v362
    %v511 = vpop.f32.mrb[0].mxu0
    %v512 = vadd.f32 0.0, %v511
    %v513 = vpop.f32.mrb[0].mxu0
    %v514 = vpop.f32.mrb[0].mxu0
    %v515 = vadd.f32 0.0, %v514
    %v516 = vpop.f32.mrb[0].mxu0
    %517 = vmatprep.mubr.bf16.mxu0 0
    %518 = vmatmul.mubr.bf16.gmra.mrb[0].mxu0 %v365
    %v519 = vpop.f32.mrb[0].mxu0
    %v520 = vadd.f32 0.0, %v519
    %v521 = vpop.f32.mrb[0].mxu0
    %v522 = vpop.f32.mrb[0].mxu0
    %v523 = vadd.f32 0.0, %v522
    %v524 = vpop.f32.mrb[0].mxu0
    %525 = vmatprep.mubr.bf16.mxu0 0
    %526 = vmatmul.mubr.bf16.gmra.mrb[0].mxu0 %v368
    %v527 = vpop.f32.mrb[0].mxu0
    %v528 = vadd.f32 0.0, %v527
    %v529 = vpop.f32.mrb[0].mxu0
    %v530 = vpop.f32.mrb[0].mxu0
    %v531 = vadd.f32 0.0, %v530
    %v532 = vpop.f32.mrb[0].mxu0
    %533 = vmatprep.mubr.bf16.mxu0 0
    %534 = vmatmul.mubr.bf16.gmra.mrb[0].mxu0 %v371
    %v535 = vpop.f32.mrb[0].mxu0
    %v536 = vadd.f32 0.0, %v535
    %v537 = vpop.f32.mrb[0].mxu0
    %v538 = vpop.f32.mrb[0].mxu0
    %v539 = vadd.f32 0.0, %v538
    %v540 = vpop.f32.mrb[0].mxu0
    %541 = vmatprep.mubr.bf16.mxu0 0
    %542 = vmatmul.mubr.bf16.gmra.mrb[0].mxu0 %v374
    %v543 = vpop.f32.mrb[0].mxu0
    %v544 = vadd.f32 0.0, %v543
    %v545 = vpop.f32.mrb[0].mxu0
    %v546 = vpop.f32.mrb[0].mxu0
    %v547 = vadd.f32 0.0, %v546
    %v548 = vpop.f32.mrb[0].mxu0
    %549 = vmatprep.mubr.bf16.mxu0 0
    %550 = vmatmul.mubr.bf16.gmra.mrb[0].mxu0 %v377
    %v551 = vpop.f32.mrb[0].mxu0
    %v552 = vadd.f32 0.0, %v551
    %v553 = vpop.f32.mrb[0].mxu0
    %v554 = vpop.f32.mrb[0].mxu0
    %v555 = vadd.f32 0.0, %v554
    %v556 = vpop.f32.mrb[0].mxu0
    %557 = vmatprep.mubr.bf16.mxu0 0
    %558 = vmatmul.mubr.bf16.gmra.mrb[0].mxu0 %v380
    %v559 = vpop.f32.mrb[0].mxu0
    %v560 = vadd.f32 0.0, %v559
    %v561 = vpop.f32.mrb[0].mxu0
    %v562 = vpop.f32.mrb[0].mxu0
    %v563 = vadd.f32 0.0, %v562
    %v564 = vpop.f32.mrb[0].mxu0
    %565 = vmatprep.mubr.bf16.mxu0 0
    %566 = vmatmul.mubr.bf16.gmra.mrb[0].mxu0 %v383
    %v567 = vpop.f32.mrb[0].mxu0
    %v568 = vadd.f32 0.0, %v567
    %v569 = vpop.f32.mrb[0].mxu0
    %v570 = vpop.f32.mrb[0].mxu0
    %v571 = vadd.f32 0.0, %v570
    %v572 = vpop.f32.mrb[0].mxu0
    %573 = vmatprep.mubr.bf16.mxu0 0
    %574 = vmatmul.mubr.bf16.gmra.mrb[0].mxu0 %v386
    %v575 = vpop.f32.mrb[0].mxu0
    %v576 = vadd.f32 0.0, %v575
    %v577 = vpop.f32.mrb[0].mxu0
    %v578 = vpop.f32.mrb[0].mxu0
    %v579 = vadd.f32 0.0, %v578
    %v580 = vpop.f32.mrb[0].mxu0
    %581 = vmatprep.mubr.bf16.mxu0 0
    %582 = vmatmul.mubr.bf16.gmra.mrb[0].mxu0 %v389
    %v583 = vpop.f32.mrb[0].mxu0
    %v584 = vadd.f32 0.0, %v583
    %v585 = vpop.f32.mrb[0].mxu0
    %v586 = vpop.f32.mrb[0].mxu0
    %v587 = vadd.f32 0.0, %v586
    %v588 = vpop.f32.mrb[0].mxu0
    %589 = vmatprep.mubr.bf16.mxu0 0
    %590 = vmatmul.mubr.bf16.gmra.mrb[0].mxu0 %v392
    %v591 = vpop.f32.mrb[0].mxu0
    %v592 = vadd.f32 0.0, %v591
    %v593 = vpop.f32.mrb[0].mxu0
    %v594 = vpop.f32.mrb[0].mxu0
    %v595 = vadd.f32 0.0, %v594
    %v596 = vpop.f32.mrb[0].mxu0
    %597 = vmatprep.mubr.bf16.mxu0 0
    %598 = vmatmul.mubr.bf16.gmra.mrb[0].mxu0 %v395
    %v599 = vpop.f32.mrb[0].mxu0
    %v600 = vadd.f32 0.0, %v599
    %v601 = vpop.f32.mrb[0].mxu0
    %v602 = vpop.f32.mrb[0].mxu0
    %v603 = vadd.f32 0.0, %v602
    %v604 = vpop.f32.mrb[0].mxu0
    %605 = vmatprep.mubr.bf16.mxu0 0
    %606 = vmatmul.mubr.bf16.gmra.mrb[0].mxu0 %v398
    %v607 = vpop.f32.mrb[0].mxu0
    %v608 = vadd.f32 0.0, %v607
    %v609 = vpop.f32.mrb[0].mxu0
    %v610 = vpop.f32.mrb[0].mxu0
    %v611 = vadd.f32 0.0, %v610
    %v612 = vpop.f32.mrb[0].mxu0
    %613 = vmatprep.mubr.bf16.mxu0 0
    %614 = vmatmul.mubr.bf16.gmra.mrb[0].mxu0 %v401
    %v615 = vpop.f32.mrb[0].mxu0
    %v616 = vadd.f32 0.0, %v615
    %v617 = vpop.f32.mrb[0].mxu0
    %v618 = vpop.f32.mrb[0].mxu0
    %v619 = vadd.f32 0.0, %v618
    %v620 = vpop.f32.mrb[0].mxu0
    %621 = vmatprep.mubr.bf16.mxu0 0
    %622 = vmatmul.mubr.bf16.gmra.mrb[0].mxu0 %v404
    %v623 = vpop.f32.mrb[0].mxu0
    %v624 = vadd.f32 0.0, %v623
    %v625 = vpop.f32.mrb[0].mxu0
    %v626 = vpop.f32.mrb[0].mxu0
    %v627 = vadd.f32 0.0, %v626
    %v628 = vpop.f32.mrb[0].mxu0
    %629 = vmatprep.mubr.bf16.mxu0 0
    %630 = vmatmul.mubr.bf16.gmra.mrb[0].mxu0 %v407
    %v631 = vpop.f32.mrb[0].mxu0
    %v632 = vadd.f32 0.0, %v631
    %v633 = vpop.f32.mrb[0].mxu0
    %v634 = vpop.f32.mrb[0].mxu0
    %v635 = vadd.f32 0.0, %v634
    %v636 = vpop.f32.mrb[0].mxu0
    %637 = vmatprep.mubr.bf16.mxu0 0
    %638 = vmatmul.mubr.bf16.gmra.mrb[0].mxu0 %v410
    %v639 = vpop.f32.mrb[0].mxu0
    %v640 = vadd.f32 0.0, %v639
    %v641 = vpop.f32.mrb[0].mxu0
    %v642 = vpop.f32.mrb[0].mxu0
    %v643 = vadd.f32 0.0, %v642
    %v644 = vpop.f32.mrb[0].mxu0
    %645 = vmatprep.mubr.bf16.mxu0 0
    %646 = vmatmul.mubr.bf16.gmra.mrb[0].mxu0 %v413
    %v647 = vpop.f32.mrb[0].mxu0
    %v648 = vadd.f32 0.0, %v647
    %v649 = vpop.f32.mrb[0].mxu0
    %v650 = vpop.f32.mrb[0].mxu0
    %v651 = vadd.f32 0.0, %v650
    %v652 = vpop.f32.mrb[0].mxu0
    %653 = vmatprep.mubr.bf16.mxu0 0
    %654 = vmatmul.mubr.bf16.gmra.mrb[0].mxu0 %v416
    %v655 = vpop.f32.mrb[0].mxu0
    %v656 = vadd.f32 0.0, %v655
    %v657 = vpop.f32.mrb[0].mxu0
    %v658 = vpop.f32.mrb[0].mxu0
    %v659 = vadd.f32 0.0, %v658
    %v660 = vpop.f32.mrb[0].mxu0
    %661 = vmatprep.mubr.bf16.mxu0 0
    %662 = vmatmul.mubr.bf16.gmra.mrb[0].mxu0 %v419
    %v663 = vpop.f32.mrb[0].mxu0
    %v664 = vadd.f32 0.0, %v663
    %v665 = vpop.f32.mrb[0].mxu0
    %v666 = vpop.f32.mrb[0].mxu0
    %v667 = vadd.f32 0.0, %v666
    %v668 = vpop.f32.mrb[0].mxu0
    %669 = vmatprep.mubr.bf16.mxu0 0
    %670 = vmatmul.mubr.bf16.gmra.mrb[0].mxu0 %v422
    %v671 = vpop.f32.mrb[0].mxu0
    %v672 = vadd.f32 0.0, %v671
    %v673 = vpop.f32.mrb[0].mxu0
    %v674 = vpop.f32.mrb[0].mxu0
    %v675 = vadd.f32 0.0, %v674
    %v676 = vpop.f32.mrb[0].mxu0
    %677 = vmatprep.mubr.bf16.mxu0 0
    %678 = vmatmul.mubr.bf16.gmra.mrb[0].mxu0 %v425
    %v679 = vpop.f32.mrb[0].mxu0
    %v680 = vadd.f32 0.0, %v679
    %v681 = vpop.f32.mrb[0].mxu0
    %v682 = vpop.f32.mrb[0].mxu0
    %v683 = vadd.f32 0.0, %v682
    %v684 = vpop.f32.mrb[0].mxu0
    %685 = vmatprep.mubr.bf16.mxu0 0
    %686 = vmatmul.mubr.bf16.gmra.mrb[0].mxu0 %v428
    %v687 = vpop.f32.mrb[0].mxu0
    %v688 = vadd.f32 0.0, %v687
    %v689 = vpop.f32.mrb[0].mxu0
    %v690 = vpop.f32.mrb[0].mxu0
    %v691 = vadd.f32 0.0, %v690
    %v692 = vpop.f32.mrb[0].mxu0
    %693 = vmatprep.mubr.bf16.mxu0 0
    %694 = vmatmul.mubr.bf16.gmra.mrb[0].mxu0 %v431
    %v695 = vpop.f32.mrb[0].mxu0
    %v696 = vadd.f32 0.0, %v695
    %v697 = vpop.f32.mrb[0].mxu0
    %v698 = vpop.f32.mrb[0].mxu0
    %v699 = vadd.f32 0.0, %v698
    %v700 = vpop.f32.mrb[0].mxu0
    %701 = vmatprep.mubr.bf16.mxu0 0
    %702 = vmatmul.mubr.bf16.gmra.mrb[0].mxu0 %v434
    %v703 = vpop.f32.mrb[0].mxu0
    %v704 = vadd.f32 0.0, %v703
    %v705 = vpop.f32.mrb[0].mxu0
    %v706 = vpop.f32.mrb[0].mxu0
    %v707 = vadd.f32 0.0, %v706
    %v708 = vpop.f32.mrb[0].mxu0
    %709 = vmatprep.mubr.bf16.mxu0 0
    %710 = vmatmul.mubr.bf16.gmra.mrb[0].mxu0 %v437
    %v711 = vpop.f32.mrb[0].mxu0
    %v712 = vadd.f32 0.0, %v711
    %v713 = vpop.f32.mrb[0].mxu0
    %v714 = vpop.f32.mrb[0].mxu0
    %v715 = vadd.f32 0.0, %v714
    %v716 = vpop.f32.mrb[0].mxu0
    %717 = vmatprep.mubr.bf16.mxu0 0
    %718 = vmatmul.mubr.bf16.gmra.mrb[0].mxu0 %v440
    %v719 = vpop.f32.mrb[0].mxu0
    %v720 = vadd.f32 0.0, %v719
    %v721 = vpop.f32.mrb[0].mxu0
    %v722 = vpop.f32.mrb[0].mxu0
    %v723 = vadd.f32 0.0, %v722
    %v724 = vpop.f32.mrb[0].mxu0
    %725 = vmatprep.mubr.bf16.mxu0 0
    %726 = vmatmul.mubr.bf16.gmra.mrb[0].mxu0 %v443
    %v727 = vpop.f32.mrb[0].mxu0
    %v728 = vadd.f32 0.0, %v727
    %v729 = vpop.f32.mrb[0].mxu0
    %v730 = vpop.f32.mrb[0].mxu0
    %v731 = vadd.f32 0.0, %v730
    %v732 = vpop.f32.mrb[0].mxu0
    %733 = vdwg.mxu0
    %v798 = vunpack.c.l.b16 %v36
    %v799 = vunpack.c.l.b16 %v37
    %v800 = vunpack.c.l.b16 %v38
    %v801 = vunpack.c.l.b16 %v39
    %v802 = vunpack.c.l.b16 %v40
    %v803 = vunpack.c.l.b16 %v41
    %v804 = vunpack.c.l.b16 %v42
    %v805 = vunpack.c.l.b16 %v43
    %v806 = vunpack.c.l.b16 %v44
    %v807 = vunpack.c.l.b16 %v45
    %v808 = vunpack.c.l.b16 %v46
    %v809 = vunpack.c.l.b16 %v47
    %v810 = vunpack.c.l.b16 %v48
    %v811 = vunpack.c.l.b16 %v49
    %v812 = vunpack.c.l.b16 %v50
    %v813 = vunpack.c.l.b16 %v51
    %v814 = vunpack.c.l.b16 %v52
    %v815 = vunpack.c.l.b16 %v53
    %v816 = vunpack.c.l.b16 %v54
    %v817 = vunpack.c.l.b16 %v55
    %v818 = vunpack.c.l.b16 %v56
    %v819 = vunpack.c.l.b16 %v57
    %v820 = vunpack.c.l.b16 %v58
    %v821 = vunpack.c.l.b16 %v59
    %v822 = vunpack.c.l.b16 %v60
    %v823 = vunpack.c.l.b16 %v61
    %v824 = vunpack.c.l.b16 %v62
    %v825 = vunpack.c.l.b16 %v63
    %v826 = vunpack.c.l.b16 %v64
    %v827 = vunpack.c.l.b16 %v65
    %v828 = vunpack.c.l.b16 %v66
    %v829 = vunpack.c.l.b16 %v67
    %v830 = vunpack.c.l.b16 %v68
    %v831 = vunpack.c.l.b16 %v69
    %v832 = vunpack.c.l.b16 %v70
    %v833 = vunpack.c.l.b16 %v71
    %v834 = vunpack.c.l.b16 %v72
    %v835 = vunpack.c.l.b16 %v73
    %v836 = vunpack.c.l.b16 %v74
    %v837 = vunpack.c.l.b16 %v75
    %v838 = vunpack.c.l.b16 %v76
    %v839 = vunpack.c.l.b16 %v77
    %v840 = vunpack.c.l.b16 %v78
    %v841 = vunpack.c.l.b16 %v79
    %v842 = vunpack.c.l.b16 %v80
    %v843 = vunpack.c.l.b16 %v81
    %v844 = vunpack.c.l.b16 %v82
    %v845 = vunpack.c.l.b16 %v83
    %v846 = vunpack.c.l.b16 %v84
    %v847 = vunpack.c.l.b16 %v85
    %v848 = vunpack.c.l.b16 %v86
    %v849 = vunpack.c.l.b16 %v87
    %v850 = vunpack.c.l.b16 %v88
    %v851 = vunpack.c.l.b16 %v89
    %v852 = vunpack.c.l.b16 %v90
    %v853 = vunpack.c.l.b16 %v91
    %v854 = vunpack.c.l.b16 %v92
    %v855 = vunpack.c.l.b16 %v93
    %v856 = vunpack.c.l.b16 %v94
    %v857 = vunpack.c.l.b16 %v95
    %v858 = vunpack.c.l.b16 %v96
    %v859 = vunpack.c.l.b16 %v97
    %v860 = vunpack.c.l.b16 %v98
    %v861 = vunpack.c.l.b16 %v99
    %v862 = vpack.c.b16 %v799, %v798
    %v863 = vpack.c.b16 %v801, %v800
    %v864 = vpack.c.b16 %v803, %v802
    %v865 = vpack.c.b16 %v805, %v804
    %v866 = vpack.c.b16 %v807, %v806
    %v867 = vpack.c.b16 %v809, %v808
    %v868 = vpack.c.b16 %v811, %v810
    %v869 = vpack.c.b16 %v813, %v812
    %v870 = vpack.c.b16 %v815, %v814
    %v871 = vpack.c.b16 %v817, %v816
    %v872 = vpack.c.b16 %v819, %v818
    %v873 = vpack.c.b16 %v821, %v820
    %v874 = vpack.c.b16 %v823, %v822
    %v875 = vpack.c.b16 %v825, %v824
    %v876 = vpack.c.b16 %v827, %v826
    %v877 = vpack.c.b16 %v829, %v828
    %v878 = vpack.c.b16 %v831, %v830
    %v879 = vpack.c.b16 %v833, %v832
    %v880 = vpack.c.b16 %v835, %v834
    %v881 = vpack.c.b16 %v837, %v836
    %v882 = vpack.c.b16 %v839, %v838
    %v883 = vpack.c.b16 %v841, %v840
    %v884 = vpack.c.b16 %v843, %v842
    %v885 = vpack.c.b16 %v845, %v844
    %v886 = vpack.c.b16 %v847, %v846
    %v887 = vpack.c.b16 %v849, %v848
    %v888 = vpack.c.b16 %v851, %v850
    %v889 = vpack.c.b16 %v853, %v852
    %v890 = vpack.c.b16 %v855, %v854
    %v891 = vpack.c.b16 %v857, %v856
    %v892 = vpack.c.b16 %v859, %v858
    %v893 = vpack.c.b16 %v861, %v860
    %v942 = vunpack.c.l.b16 %v100
    %v943 = vunpack.c.l.b16 %v101
    %v944 = vunpack.c.l.b16 %v102
    %v945 = vunpack.c.l.b16 %v103
    %v946 = vunpack.c.l.b16 %v104
    %v947 = vunpack.c.l.b16 %v105
    %v948 = vunpack.c.l.b16 %v106
    %v949 = vunpack.c.l.b16 %v107
    %v950 = vunpack.c.l.b16 %v108
    %v951 = vunpack.c.l.b16 %v109
    %v952 = vunpack.c.l.b16 %v110
    %v953 = vunpack.c.l.b16 %v111
    %v954 = vunpack.c.l.b16 %v112
    %v955 = vunpack.c.l.b16 %v113
    %v956 = vunpack.c.l.b16 %v114
    %v957 = vunpack.c.l.b16 %v115
    %v958 = vpack.c.b16 %v943, %v942
    %v959 = vpack.c.b16 %v945, %v944
    %v960 = vpack.c.b16 %v947, %v946
    %v961 = vpack.c.b16 %v949, %v948
    %v962 = vpack.c.b16 %v951, %v950
    %v963 = vpack.c.b16 %v953, %v952
    %v964 = vpack.c.b16 %v955, %v954
    %v965 = vpack.c.b16 %v957, %v956
    %974 = vmatprep.subr.bf16.mxu0 0
    %975 = vmatpush1.bf16.msra.mxu0 %v958
    %976 = vmatprep.subr.bf16.mxu0 0
    %977 = vmatpush1.bf16.msra.mxu0 %v959
    %978 = vmatprep.subr.bf16.mxu0 0
    %979 = vmatpush1.bf16.msra.mxu0 %v960
    %980 = vmatprep.subr.bf16.mxu0 0
    %981 = vmatpush1.bf16.msra.mxu0 %v961
    %982 = vmatprep.subr.bf16.mxu0 0
    %983 = vmatpush1.bf16.msra.mxu0 %v962
    %984 = vmatprep.subr.bf16.mxu0 0
    %985 = vmatpush1.bf16.msra.mxu0 %v963
    %986 = vmatprep.subr.bf16.mxu0 0
    %987 = vmatpush1.bf16.msra.mxu0 %v964
    %988 = vmatprep.subr.bf16.mxu0 0
    %989 = vmatpush1.bf16.msra.mxu0 %v965
    %990 = vmatprep.subr.bf16.mxu0 0
    %991 = vmatpush1.bf16.msra.mxu0 0
    %992 = vmatprep.subr.bf16.mxu0 0
    %993 = vmatpush1.bf16.msra.mxu0 0
    %994 = vmatprep.subr.bf16.mxu0 0
    %995 = vmatpush1.bf16.msra.mxu0 0
    %996 = vmatprep.subr.bf16.mxu0 0
    %997 = vmatpush1.bf16.msra.mxu0 0
    %998 = vmatprep.subr.bf16.mxu0 0
    %999 = vmatpush1.bf16.msra.mxu0 0
    %1000 = vmatprep.subr.bf16.mxu0 0
    %1001 = vmatpush1.bf16.msra.mxu0 0
    %1002 = vmatprep.subr.bf16.mxu0 0
    %1003 = vmatpush1.bf16.msra.mxu0 0
    %1004 = vmatprep.subr.bf16.mxu0 0
    %1005 = vmatpush1.bf16.msra.mxu0 0
    %1006 = vmatprep.mubr.bf16.mxu0 0
    %1007 = vmatmul.mubr.bf16.gmra.mrb[0].mxu0 %v862
    %v1008 = vpop.f32.mrb[0].mxu0
    %v1009 = vadd.f32 %v480, %v1008
    %v1010 = vpop.f32.mrb[0].mxu0
    %v1011 = vpop.f32.mrb[0].mxu0
    %v1012 = vadd.f32 %v483, %v1011
    %v1013 = vpop.f32.mrb[0].mxu0
    %1014 = vmatprep.mubr.bf16.mxu0 0
    %1015 = vmatmul.mubr.bf16.gmra.mrb[0].mxu0 %v863
    %v1016 = vpop.f32.mrb[0].mxu0
    %v1017 = vadd.f32 %v488, %v1016
    %v1018 = vpop.f32.mrb[0].mxu0
    %v1019 = vpop.f32.mrb[0].mxu0
    %v1020 = vadd.f32 %v491, %v1019
    %v1021 = vpop.f32.mrb[0].mxu0
    %1022 = vmatprep.mubr.bf16.mxu0 0
    %1023 = vmatmul.mubr.bf16.gmra.mrb[0].mxu0 %v864
    %v1024 = vpop.f32.mrb[0].mxu0
    %v1025 = vadd.f32 %v496, %v1024
    %v1026 = vpop.f32.mrb[0].mxu0
    %v1027 = vpop.f32.mrb[0].mxu0
    %v1028 = vadd.f32 %v499, %v1027
    %v1029 = vpop.f32.mrb[0].mxu0
    %1030 = vmatprep.mubr.bf16.mxu0 0
    %1031 = vmatmul.mubr.bf16.gmra.mrb[0].mxu0 %v865
    %v1032 = vpop.f32.mrb[0].mxu0
    %v1033 = vadd.f32 %v504, %v1032
    %v1034 = vpop.f32.mrb[0].mxu0
    %v1035 = vpop.f32.mrb[0].mxu0
    %v1036 = vadd.f32 %v507, %v1035
    %v1037 = vpop.f32.mrb[0].mxu0
    %1038 = vmatprep.mubr.bf16.mxu0 0
    %1039 = vmatmul.mubr.bf16.gmra.mrb[0].mxu0 %v866
    %v1040 = vpop.f32.mrb[0].mxu0
    %v1041 = vadd.f32 %v512, %v1040
    %v1042 = vpop.f32.mrb[0].mxu0
    %v1043 = vpop.f32.mrb[0].mxu0
    %v1044 = vadd.f32 %v515, %v1043
    %v1045 = vpop.f32.mrb[0].mxu0
    %1046 = vmatprep.mubr.bf16.mxu0 0
    %1047 = vmatmul.mubr.bf16.gmra.mrb[0].mxu0 %v867
    %v1048 = vpop.f32.mrb[0].mxu0
    %v1049 = vadd.f32 %v520, %v1048
    %v1050 = vpop.f32.mrb[0].mxu0
    %v1051 = vpop.f32.mrb[0].mxu0
    %v1052 = vadd.f32 %v523, %v1051
    %v1053 = vpop.f32.mrb[0].mxu0
    %1054 = vmatprep.mubr.bf16.mxu0 0
    %1055 = vmatmul.mubr.bf16.gmra.mrb[0].mxu0 %v868
    %v1056 = vpop.f32.mrb[0].mxu0
    %v1057 = vadd.f32 %v528, %v1056
    %v1058 = vpop.f32.mrb[0].mxu0
    %v1059 = vpop.f32.mrb[0].mxu0
    %v1060 = vadd.f32 %v531, %v1059
    %v1061 = vpop.f32.mrb[0].mxu0
    %1062 = vmatprep.mubr.bf16.mxu0 0
    %1063 = vmatmul.mubr.bf16.gmra.mrb[0].mxu0 %v869
    %v1064 = vpop.f32.mrb[0].mxu0
    %v1065 = vadd.f32 %v536, %v1064
    %v1066 = vpop.f32.mrb[0].mxu0
    %v1067 = vpop.f32.mrb[0].mxu0
    %v1068 = vadd.f32 %v539, %v1067
    %v1069 = vpop.f32.mrb[0].mxu0
    %1070 = vmatprep.mubr.bf16.mxu0 0
    %1071 = vmatmul.mubr.bf16.gmra.mrb[0].mxu0 %v870
    %v1072 = vpop.f32.mrb[0].mxu0
    %v1073 = vadd.f32 %v544, %v1072
    %v1074 = vpop.f32.mrb[0].mxu0
    %v1075 = vpop.f32.mrb[0].mxu0
    %v1076 = vadd.f32 %v547, %v1075
    %v1077 = vpop.f32.mrb[0].mxu0
    %1078 = vmatprep.mubr.bf16.mxu0 0
    %1079 = vmatmul.mubr.bf16.gmra.mrb[0].mxu0 %v871
    %v1080 = vpop.f32.mrb[0].mxu0
    %v1081 = vadd.f32 %v552, %v1080
    %v1082 = vpop.f32.mrb[0].mxu0
    %v1083 = vpop.f32.mrb[0].mxu0
    %v1084 = vadd.f32 %v555, %v1083
    %v1085 = vpop.f32.mrb[0].mxu0
    %1086 = vmatprep.mubr.bf16.mxu0 0
    %1087 = vmatmul.mubr.bf16.gmra.mrb[0].mxu0 %v872
    %v1088 = vpop.f32.mrb[0].mxu0
    %v1089 = vadd.f32 %v560, %v1088
    %v1090 = vpop.f32.mrb[0].mxu0
    %v1091 = vpop.f32.mrb[0].mxu0
    %v1092 = vadd.f32 %v563, %v1091
    %v1093 = vpop.f32.mrb[0].mxu0
    %1094 = vmatprep.mubr.bf16.mxu0 0
    %1095 = vmatmul.mubr.bf16.gmra.mrb[0].mxu0 %v873
    %v1096 = vpop.f32.mrb[0].mxu0
    %v1097 = vadd.f32 %v568, %v1096
    %v1098 = vpop.f32.mrb[0].mxu0
    %v1099 = vpop.f32.mrb[0].mxu0
    %v1100 = vadd.f32 %v571, %v1099
    %v1101 = vpop.f32.mrb[0].mxu0
    %1102 = vmatprep.mubr.bf16.mxu0 0
    %1103 = vmatmul.mubr.bf16.gmra.mrb[0].mxu0 %v874
    %v1104 = vpop.f32.mrb[0].mxu0
    %v1105 = vadd.f32 %v576, %v1104
    %v1106 = vpop.f32.mrb[0].mxu0
    %v1107 = vpop.f32.mrb[0].mxu0
    %v1108 = vadd.f32 %v579, %v1107
    %v1109 = vpop.f32.mrb[0].mxu0
    %1110 = vmatprep.mubr.bf16.mxu0 0
    %1111 = vmatmul.mubr.bf16.gmra.mrb[0].mxu0 %v875
    %v1112 = vpop.f32.mrb[0].mxu0
    %v1113 = vadd.f32 %v584, %v1112
    %v1114 = vpop.f32.mrb[0].mxu0
    %v1115 = vpop.f32.mrb[0].mxu0
    %v1116 = vadd.f32 %v587, %v1115
    %v1117 = vpop.f32.mrb[0].mxu0
    %1118 = vmatprep.mubr.bf16.mxu0 0
    %1119 = vmatmul.mubr.bf16.gmra.mrb[0].mxu0 %v876
    %v1120 = vpop.f32.mrb[0].mxu0
    %v1121 = vadd.f32 %v592, %v1120
    %v1122 = vpop.f32.mrb[0].mxu0
    %v1123 = vpop.f32.mrb[0].mxu0
    %v1124 = vadd.f32 %v595, %v1123
    %v1125 = vpop.f32.mrb[0].mxu0
    %1126 = vmatprep.mubr.bf16.mxu0 0
    %1127 = vmatmul.mubr.bf16.gmra.mrb[0].mxu0 %v877
    %v1128 = vpop.f32.mrb[0].mxu0
    %v1129 = vadd.f32 %v600, %v1128
    %v1130 = vpop.f32.mrb[0].mxu0
    %v1131 = vpop.f32.mrb[0].mxu0
    %v1132 = vadd.f32 %v603, %v1131
    %v1133 = vpop.f32.mrb[0].mxu0
    %1134 = vmatprep.mubr.bf16.mxu0 0
    %1135 = vmatmul.mubr.bf16.gmra.mrb[0].mxu0 %v878
    %v1136 = vpop.f32.mrb[0].mxu0
    %v1137 = vadd.f32 %v608, %v1136
    %v1138 = vpop.f32.mrb[0].mxu0
    %v1139 = vpop.f32.mrb[0].mxu0
    %v1140 = vadd.f32 %v611, %v1139
    %v1141 = vpop.f32.mrb[0].mxu0
    %1142 = vmatprep.mubr.bf16.mxu0 0
    %1143 = vmatmul.mubr.bf16.gmra.mrb[0].mxu0 %v879
    %v1144 = vpop.f32.mrb[0].mxu0
    %v1145 = vadd.f32 %v616, %v1144
    %v1146 = vpop.f32.mrb[0].mxu0
    %v1147 = vpop.f32.mrb[0].mxu0
    %v1148 = vadd.f32 %v619, %v1147
    %v1149 = vpop.f32.mrb[0].mxu0
    %1150 = vmatprep.mubr.bf16.mxu0 0
    %1151 = vmatmul.mubr.bf16.gmra.mrb[0].mxu0 %v880
    %v1152 = vpop.f32.mrb[0].mxu0
    %v1153 = vadd.f32 %v624, %v1152
    %v1154 = vpop.f32.mrb[0].mxu0
    %v1155 = vpop.f32.mrb[0].mxu0
    %v1156 = vadd.f32 %v627, %v1155
    %v1157 = vpop.f32.mrb[0].mxu0
    %1158 = vmatprep.mubr.bf16.mxu0 0
    %1159 = vmatmul.mubr.bf16.gmra.mrb[0].mxu0 %v881
    %v1160 = vpop.f32.mrb[0].mxu0
    %v1161 = vadd.f32 %v632, %v1160
    %v1162 = vpop.f32.mrb[0].mxu0
    %v1163 = vpop.f32.mrb[0].mxu0
    %v1164 = vadd.f32 %v635, %v1163
    %v1165 = vpop.f32.mrb[0].mxu0
    %1166 = vmatprep.mubr.bf16.mxu0 0
    %1167 = vmatmul.mubr.bf16.gmra.mrb[0].mxu0 %v882
    %v1168 = vpop.f32.mrb[0].mxu0
    %v1169 = vadd.f32 %v640, %v1168
    %v1170 = vpop.f32.mrb[0].mxu0
    %v1171 = vpop.f32.mrb[0].mxu0
    %v1172 = vadd.f32 %v643, %v1171
    %v1173 = vpop.f32.mrb[0].mxu0
    %1174 = vmatprep.mubr.bf16.mxu0 0
    %1175 = vmatmul.mubr.bf16.gmra.mrb[0].mxu0 %v883
    %v1176 = vpop.f32.mrb[0].mxu0
    %v1177 = vadd.f32 %v648, %v1176
    %v1178 = vpop.f32.mrb[0].mxu0
    %v1179 = vpop.f32.mrb[0].mxu0
    %v1180 = vadd.f32 %v651, %v1179
    %v1181 = vpop.f32.mrb[0].mxu0
    %1182 = vmatprep.mubr.bf16.mxu0 0
    %1183 = vmatmul.mubr.bf16.gmra.mrb[0].mxu0 %v884
    %v1184 = vpop.f32.mrb[0].mxu0
    %v1185 = vadd.f32 %v656, %v1184
    %v1186 = vpop.f32.mrb[0].mxu0
    %v1187 = vpop.f32.mrb[0].mxu0
    %v1188 = vadd.f32 %v659, %v1187
    %v1189 = vpop.f32.mrb[0].mxu0
    %1190 = vmatprep.mubr.bf16.mxu0 0
    %1191 = vmatmul.mubr.bf16.gmra.mrb[0].mxu0 %v885
    %v1192 = vpop.f32.mrb[0].mxu0
    %v1193 = vadd.f32 %v664, %v1192
    %v1194 = vpop.f32.mrb[0].mxu0
    %v1195 = vpop.f32.mrb[0].mxu0
    %v1196 = vadd.f32 %v667, %v1195
    %v1197 = vpop.f32.mrb[0].mxu0
    %1198 = vmatprep.mubr.bf16.mxu0 0
    %1199 = vmatmul.mubr.bf16.gmra.mrb[0].mxu0 %v886
    %v1200 = vpop.f32.mrb[0].mxu0
    %v1201 = vadd.f32 %v672, %v1200
    %v1202 = vpop.f32.mrb[0].mxu0
    %v1203 = vpop.f32.mrb[0].mxu0
    %v1204 = vadd.f32 %v675, %v1203
    %v1205 = vpop.f32.mrb[0].mxu0
    %1206 = vmatprep.mubr.bf16.mxu0 0
    %1207 = vmatmul.mubr.bf16.gmra.mrb[0].mxu0 %v887
    %v1208 = vpop.f32.mrb[0].mxu0
    %v1209 = vadd.f32 %v680, %v1208
    %v1210 = vpop.f32.mrb[0].mxu0
    %v1211 = vpop.f32.mrb[0].mxu0
    %v1212 = vadd.f32 %v683, %v1211
    %v1213 = vpop.f32.mrb[0].mxu0
    %1214 = vmatprep.mubr.bf16.mxu0 0
    %1215 = vmatmul.mubr.bf16.gmra.mrb[0].mxu0 %v888
    %v1216 = vpop.f32.mrb[0].mxu0
    %v1217 = vadd.f32 %v688, %v1216
    %v1218 = vpop.f32.mrb[0].mxu0
    %v1219 = vpop.f32.mrb[0].mxu0
    %v1220 = vadd.f32 %v691, %v1219
    %v1221 = vpop.f32.mrb[0].mxu0
    %1222 = vmatprep.mubr.bf16.mxu0 0
    %1223 = vmatmul.mubr.bf16.gmra.mrb[0].mxu0 %v889
    %v1224 = vpop.f32.mrb[0].mxu0
    %v1225 = vadd.f32 %v696, %v1224
    %v1226 = vpop.f32.mrb[0].mxu0
    %v1227 = vpop.f32.mrb[0].mxu0
    %v1228 = vadd.f32 %v699, %v1227
    %v1229 = vpop.f32.mrb[0].mxu0
    %1230 = vmatprep.mubr.bf16.mxu0 0
    %1231 = vmatmul.mubr.bf16.gmra.mrb[0].mxu0 %v890
    %v1232 = vpop.f32.mrb[0].mxu0
    %v1233 = vadd.f32 %v704, %v1232
    %v1234 = vpop.f32.mrb[0].mxu0
    %v1235 = vpop.f32.mrb[0].mxu0
    %v1236 = vadd.f32 %v707, %v1235
    %v1237 = vpop.f32.mrb[0].mxu0
    %1238 = vmatprep.mubr.bf16.mxu0 0
    %1239 = vmatmul.mubr.bf16.gmra.mrb[0].mxu0 %v891
    %v1240 = vpop.f32.mrb[0].mxu0
    %v1241 = vadd.f32 %v712, %v1240
    %v1242 = vpop.f32.mrb[0].mxu0
    %v1243 = vpop.f32.mrb[0].mxu0
    %v1244 = vadd.f32 %v715, %v1243
    %v1245 = vpop.f32.mrb[0].mxu0
    %1246 = vmatprep.mubr.bf16.mxu0 0
    %1247 = vmatmul.mubr.bf16.gmra.mrb[0].mxu0 %v892
    %v1248 = vpop.f32.mrb[0].mxu0
    %v1249 = vadd.f32 %v720, %v1248
    %v1250 = vpop.f32.mrb[0].mxu0
    %v1251 = vpop.f32.mrb[0].mxu0
    %v1252 = vadd.f32 %v723, %v1251
    %v1253 = vpop.f32.mrb[0].mxu0
    %1254 = vmatprep.mubr.bf16.mxu0 0
    %1255 = vmatmul.mubr.bf16.gmra.mrb[0].mxu0 %v893
    %v1256 = vpop.f32.mrb[0].mxu0
    %v1257 = vadd.f32 %v728, %v1256
    %v1258 = vpop.f32.mrb[0].mxu0
    %v1259 = vpop.f32.mrb[0].mxu0
    %v1260 = vadd.f32 %v731, %v1259
    %v1261 = vpop.f32.mrb[0].mxu0
    %1262 = vdwg.mxu0
    %v1263 = vld [vmem:[%s4] sm:$0x1]
    %v1265 = vlaneseq
    %v1266 = vshrl.u32 %v1265, 7
    %v1267 = vsub.s32 0, %v1266
    %v1268 = vrot.slane %v1263, %v1267
    %v1270 = vadd.f32 %v1009, %v1268
    %v1271 = vadd.f32 %v1012, %v1268
    %v1272 = vadd.f32 %v1017, %v1268
    %v1273 = vadd.f32 %v1020, %v1268
    %v1274 = vadd.f32 %v1025, %v1268
    %v1275 = vadd.f32 %v1028, %v1268
    %v1276 = vadd.f32 %v1033, %v1268
    %v1277 = vadd.f32 %v1036, %v1268
    %v1278 = vadd.f32 %v1041, %v1268
    %v1279 = vadd.f32 %v1044, %v1268
    %v1280 = vadd.f32 %v1049, %v1268
    %v1281 = vadd.f32 %v1052, %v1268
    %v1282 = vadd.f32 %v1057, %v1268
    %v1283 = vadd.f32 %v1060, %v1268
    %v1284 = vadd.f32 %v1065, %v1268
    %v1285 = vadd.f32 %v1068, %v1268
    %v1286 = vadd.f32 %v1073, %v1268
    %v1287 = vadd.f32 %v1076, %v1268
    %v1288 = vadd.f32 %v1081, %v1268
    %v1289 = vadd.f32 %v1084, %v1268
    %v1290 = vadd.f32 %v1089, %v1268
    %v1291 = vadd.f32 %v1092, %v1268
    %v1292 = vadd.f32 %v1097, %v1268
    %v1293 = vadd.f32 %v1100, %v1268
    %v1294 = vadd.f32 %v1105, %v1268
    %v1295 = vadd.f32 %v1108, %v1268
    %v1296 = vadd.f32 %v1113, %v1268
    %v1297 = vadd.f32 %v1116, %v1268
    %v1298 = vadd.f32 %v1121, %v1268
    %v1299 = vadd.f32 %v1124, %v1268
    %v1300 = vadd.f32 %v1129, %v1268
    %v1301 = vadd.f32 %v1132, %v1268
    %v1302 = vadd.f32 %v1137, %v1268
    %v1303 = vadd.f32 %v1140, %v1268
    %v1304 = vadd.f32 %v1145, %v1268
    %v1305 = vadd.f32 %v1148, %v1268
    %v1306 = vadd.f32 %v1153, %v1268
    %v1307 = vadd.f32 %v1156, %v1268
    %v1308 = vadd.f32 %v1161, %v1268
    %v1309 = vadd.f32 %v1164, %v1268
    %v1310 = vadd.f32 %v1169, %v1268
    %v1311 = vadd.f32 %v1172, %v1268
    %v1312 = vadd.f32 %v1177, %v1268
    %v1313 = vadd.f32 %v1180, %v1268
    %v1314 = vadd.f32 %v1185, %v1268
    %v1315 = vadd.f32 %v1188, %v1268
    %v1316 = vadd.f32 %v1193, %v1268
    %v1317 = vadd.f32 %v1196, %v1268
    %v1318 = vadd.f32 %v1201, %v1268
    %v1319 = vadd.f32 %v1204, %v1268
    %v1320 = vadd.f32 %v1209, %v1268
    %v1321 = vadd.f32 %v1212, %v1268
    %v1322 = vadd.f32 %v1217, %v1268
    %v1323 = vadd.f32 %v1220, %v1268
    %v1324 = vadd.f32 %v1225, %v1268
    %v1325 = vadd.f32 %v1228, %v1268
    %v1326 = vadd.f32 %v1233, %v1268
    %v1327 = vadd.f32 %v1236, %v1268
    %v1328 = vadd.f32 %v1241, %v1268
    %v1329 = vadd.f32 %v1244, %v1268
    %v1330 = vadd.f32 %v1249, %v1268
    %v1331 = vadd.f32 %v1252, %v1268
    %v1332 = vadd.f32 %v1257, %v1268
    %v1333 = vadd.f32 %v1260, %v1268
    %v1334 = vmax.f32 %v1270, 0.0
    %v1335 = vmax.f32 %v1271, 0.0
    %v1336 = vmax.f32 %v1272, 0.0
    %v1337 = vmax.f32 %v1273, 0.0
    %v1338 = vmax.f32 %v1274, 0.0
    %v1339 = vmax.f32 %v1275, 0.0
    %v1340 = vmax.f32 %v1276, 0.0
    %v1341 = vmax.f32 %v1277, 0.0
    %v1342 = vmax.f32 %v1278, 0.0
    %v1343 = vmax.f32 %v1279, 0.0
    %v1344 = vmax.f32 %v1280, 0.0
    %v1345 = vmax.f32 %v1281, 0.0
    %v1346 = vmax.f32 %v1282, 0.0
    %v1347 = vmax.f32 %v1283, 0.0
    %v1348 = vmax.f32 %v1284, 0.0
    %v1349 = vmax.f32 %v1285, 0.0
    %v1350 = vmax.f32 %v1286, 0.0
    %v1351 = vmax.f32 %v1287, 0.0
    %v1352 = vmax.f32 %v1288, 0.0
    %v1353 = vmax.f32 %v1289, 0.0
    %v1354 = vmax.f32 %v1290, 0.0
    %v1355 = vmax.f32 %v1291, 0.0
    %v1356 = vmax.f32 %v1292, 0.0
    %v1357 = vmax.f32 %v1293, 0.0
    %v1358 = vmax.f32 %v1294, 0.0
    %v1359 = vmax.f32 %v1295, 0.0
    %v1360 = vmax.f32 %v1296, 0.0
    %v1361 = vmax.f32 %v1297, 0.0
    %v1362 = vmax.f32 %v1298, 0.0
    %v1363 = vmax.f32 %v1299, 0.0
    %v1364 = vmax.f32 %v1300, 0.0
    %v1365 = vmax.f32 %v1301, 0.0
    %v1366 = vmax.f32 %v1302, 0.0
    %v1367 = vmax.f32 %v1303, 0.0
    %v1368 = vmax.f32 %v1304, 0.0
    %v1369 = vmax.f32 %v1305, 0.0
    %v1370 = vmax.f32 %v1306, 0.0
    %v1371 = vmax.f32 %v1307, 0.0
    %v1372 = vmax.f32 %v1308, 0.0
    %v1373 = vmax.f32 %v1309, 0.0
    %v1374 = vmax.f32 %v1310, 0.0
    %v1375 = vmax.f32 %v1311, 0.0
    %v1376 = vmax.f32 %v1312, 0.0
    %v1377 = vmax.f32 %v1313, 0.0
    %v1378 = vmax.f32 %v1314, 0.0
    %v1379 = vmax.f32 %v1315, 0.0
    %v1380 = vmax.f32 %v1316, 0.0
    %v1381 = vmax.f32 %v1317, 0.0
    %v1382 = vmax.f32 %v1318, 0.0
    %v1383 = vmax.f32 %v1319, 0.0
    %v1384 = vmax.f32 %v1320, 0.0
    %v1385 = vmax.f32 %v1321, 0.0
    %v1386 = vmax.f32 %v1322, 0.0
    %v1387 = vmax.f32 %v1323, 0.0
    %v1388 = vmax.f32 %v1324, 0.0
    %v1389 = vmax.f32 %v1325, 0.0
    %v1390 = vmax.f32 %v1326, 0.0
    %v1391 = vmax.f32 %v1327, 0.0
    %v1392 = vmax.f32 %v1328, 0.0
    %v1393 = vmax.f32 %v1329, 0.0
    %v1394 = vmax.f32 %v1330, 0.0
    %v1395 = vmax.f32 %v1331, 0.0
    %v1396 = vmax.f32 %v1332, 0.0
    %v1397 = vmax.f32 %v1333, 0.0
    %v1398 = vpack.c.bf16 %v1335, %v1334
    %v1399 = vpack.c.bf16 %v1337, %v1336
    %v1400 = vpack.c.bf16 %v1339, %v1338
    %v1401 = vpack.c.bf16 %v1341, %v1340
    %v1402 = vpack.c.bf16 %v1343, %v1342
    %v1403 = vpack.c.bf16 %v1345, %v1344
    %v1404 = vpack.c.bf16 %v1347, %v1346
    %v1405 = vpack.c.bf16 %v1349, %v1348
    %v1406 = vpack.c.bf16 %v1351, %v1350
    %v1407 = vpack.c.bf16 %v1353, %v1352
    %v1408 = vpack.c.bf16 %v1355, %v1354
    %v1409 = vpack.c.bf16 %v1357, %v1356
    %v1410 = vpack.c.bf16 %v1359, %v1358
    %v1411 = vpack.c.bf16 %v1361, %v1360
    %v1412 = vpack.c.bf16 %v1363, %v1362
    %v1413 = vpack.c.bf16 %v1365, %v1364
    %v1414 = vpack.c.bf16 %v1367, %v1366
    %v1415 = vpack.c.bf16 %v1369, %v1368
    %v1416 = vpack.c.bf16 %v1371, %v1370
    %v1417 = vpack.c.bf16 %v1373, %v1372
    %v1418 = vpack.c.bf16 %v1375, %v1374
    %v1419 = vpack.c.bf16 %v1377, %v1376
    %v1420 = vpack.c.bf16 %v1379, %v1378
    %v1421 = vpack.c.bf16 %v1381, %v1380
    %v1422 = vpack.c.bf16 %v1383, %v1382
    %v1423 = vpack.c.bf16 %v1385, %v1384
    %v1424 = vpack.c.bf16 %v1387, %v1386
    %v1425 = vpack.c.bf16 %v1389, %v1388
    %v1426 = vpack.c.bf16 %v1391, %v1390
    %v1427 = vpack.c.bf16 %v1393, %v1392
    %v1428 = vpack.c.bf16 %v1395, %v1394
    %v1429 = vpack.c.bf16 %v1397, %v1396
    %v1430 = vld [vmem:[%s5] sm:$0xf]
    %v1431 = vld [vmem:[%s5 + $0x4] sm:$0xf]
    %v1432 = vld [vmem:[%s5 + $0x8] sm:$0xf]
    %v1433 = vld [vmem:[%s5 + $0xc] sm:$0xf]
    %v1434 = vld [vmem:[%s6] sm:$0x1]
    %v1436 = vlaneseq
    %v1437 = vshrl.u32 %v1436, 7
    %v1438 = vsub.s32 0, %v1437
    %v1439 = vrot.slane %v1434, %v1438
    %v1445 = vunpack.c.l.b16 %v1430
    %v1446 = vunpack.c.l.b16 %v1431
    %v1447 = vunpack.c.l.b16 %v1432
    %v1448 = vunpack.c.l.b16 %v1433
    %v1449 = vpack.c.b16 %v1446, %v1445
    %v1450 = vpack.c.b16 %v1448, %v1447
    %vm1453 = vcmask 261120
    %v1455 = vsel %vm1453, %v1398, 0
    %v1458 = vsel %vm1453, %v1399, 0
    %v1461 = vsel %vm1453, %v1400, 0
    %v1464 = vsel %vm1453, %v1401, 0
    %v1467 = vsel %vm1453, %v1402, 0
    %v1470 = vsel %vm1453, %v1403, 0
    %v1473 = vsel %vm1453, %v1404, 0
    %v1476 = vsel %vm1453, %v1405, 0
    %v1479 = vsel %vm1453, %v1406, 0
    %v1482 = vsel %vm1453, %v1407, 0
    %v1485 = vsel %vm1453, %v1408, 0
    %v1488 = vsel %vm1453, %v1409, 0
    %v1491 = vsel %vm1453, %v1410, 0
    %v1494 = vsel %vm1453, %v1411, 0
    %v1497 = vsel %vm1453, %v1412, 0
    %v1500 = vsel %vm1453, %v1413, 0
    %v1503 = vsel %vm1453, %v1414, 0
    %v1506 = vsel %vm1453, %v1415, 0
    %v1509 = vsel %vm1453, %v1416, 0
    %v1512 = vsel %vm1453, %v1417, 0
    %v1515 = vsel %vm1453, %v1418, 0
    %v1518 = vsel %vm1453, %v1419, 0
    %v1521 = vsel %vm1453, %v1420, 0
    %v1524 = vsel %vm1453, %v1421, 0
    %v1527 = vsel %vm1453, %v1422, 0
    %v1530 = vsel %vm1453, %v1423, 0
    %v1533 = vsel %vm1453, %v1424, 0
    %v1536 = vsel %vm1453, %v1425, 0
    %v1539 = vsel %vm1453, %v1426, 0
    %v1542 = vsel %vm1453, %v1427, 0
    %v1545 = vsel %vm1453, %v1428, 0
    %v1548 = vsel %vm1453, %v1429, 0
    %1550 = vmatprep.subr.bf16.mxu0 0
    %1551 = vmatpush1.bf16.msra.mxu0 %v1449
    %1552 = vmatprep.subr.bf16.mxu0 0
    %1553 = vmatpush1.bf16.msra.mxu0 %v1450
    %1554 = vmatprep.subr.bf16.mxu0 0
    %1555 = vmatpush1.bf16.msra.mxu0 0
    %1556 = vmatprep.subr.bf16.mxu0 0
    %1557 = vmatpush1.bf16.msra.mxu0 0
    %1558 = vmatprep.subr.bf16.mxu0 0
    %1559 = vmatpush1.bf16.msra.mxu0 0
    %1560 = vmatprep.subr.bf16.mxu0 0
    %1561 = vmatpush1.bf16.msra.mxu0 0
    %1562 = vmatprep.subr.bf16.mxu0 0
    %1563 = vmatpush1.bf16.msra.mxu0 0
    %1564 = vmatprep.subr.bf16.mxu0 0
    %1565 = vmatpush1.bf16.msra.mxu0 0
    %1566 = vmatprep.subr.bf16.mxu0 0
    %1567 = vmatpush1.bf16.msra.mxu0 0
    %1568 = vmatprep.subr.bf16.mxu0 0
    %1569 = vmatpush1.bf16.msra.mxu0 0
    %1570 = vmatprep.subr.bf16.mxu0 0
    %1571 = vmatpush1.bf16.msra.mxu0 0
    %1572 = vmatprep.subr.bf16.mxu0 0
    %1573 = vmatpush1.bf16.msra.mxu0 0
    %1574 = vmatprep.subr.bf16.mxu0 0
    %1575 = vmatpush1.bf16.msra.mxu0 0
    %1576 = vmatprep.subr.bf16.mxu0 0
    %1577 = vmatpush1.bf16.msra.mxu0 0
    %1578 = vmatprep.subr.bf16.mxu0 0
    %1579 = vmatpush1.bf16.msra.mxu0 0
    %1580 = vmatprep.subr.bf16.mxu0 0
    %1581 = vmatpush1.bf16.msra.mxu0 0
    %1582 = vmatprep.mubr.bf16.mxu0 0
    %1583 = vmatmul.mubr.bf16.gmra.mrb[0].mxu0 %v1455
    %v1584 = vpop.f32.mrb[0].mxu0
    %v1585 = vadd.f32 %v1439, %v1584
    %v1586 = vpop.f32.mrb[0].mxu0
    %v1587 = vpop.f32.mrb[0].mxu0
    %v1588 = vadd.f32 %v1439, %v1587
    %v1589 = vpop.f32.mrb[0].mxu0
    %1590 = vmatprep.mubr.bf16.mxu0 0
    %1591 = vmatmul.mubr.bf16.gmra.mrb[0].mxu0 %v1458
    %v1592 = vpop.f32.mrb[0].mxu0
    %v1593 = vadd.f32 %v1439, %v1592
    %v1594 = vpop.f32.mrb[0].mxu0
    %v1595 = vpop.f32.mrb[0].mxu0
    %v1596 = vadd.f32 %v1439, %v1595
    %v1597 = vpop.f32.mrb[0].mxu0
    %1598 = vmatprep.mubr.bf16.mxu0 0
    %1599 = vmatmul.mubr.bf16.gmra.mrb[0].mxu0 %v1461
    %v1600 = vpop.f32.mrb[0].mxu0
    %v1601 = vadd.f32 %v1439, %v1600
    %v1602 = vpop.f32.mrb[0].mxu0
    %v1603 = vpop.f32.mrb[0].mxu0
    %v1604 = vadd.f32 %v1439, %v1603
    %v1605 = vpop.f32.mrb[0].mxu0
    %1606 = vmatprep.mubr.bf16.mxu0 0
    %1607 = vmatmul.mubr.bf16.gmra.mrb[0].mxu0 %v1464
    %v1608 = vpop.f32.mrb[0].mxu0
    %v1609 = vadd.f32 %v1439, %v1608
    %v1610 = vpop.f32.mrb[0].mxu0
    %v1611 = vpop.f32.mrb[0].mxu0
    %v1612 = vadd.f32 %v1439, %v1611
    %v1613 = vpop.f32.mrb[0].mxu0
    %1614 = vmatprep.mubr.bf16.mxu0 0
    %1615 = vmatmul.mubr.bf16.gmra.mrb[0].mxu0 %v1467
    %v1616 = vpop.f32.mrb[0].mxu0
    %v1617 = vadd.f32 %v1439, %v1616
    %v1618 = vpop.f32.mrb[0].mxu0
    %v1619 = vpop.f32.mrb[0].mxu0
    %v1620 = vadd.f32 %v1439, %v1619
    %v1621 = vpop.f32.mrb[0].mxu0
    %1622 = vmatprep.mubr.bf16.mxu0 0
    %1623 = vmatmul.mubr.bf16.gmra.mrb[0].mxu0 %v1470
    %v1624 = vpop.f32.mrb[0].mxu0
    %v1625 = vadd.f32 %v1439, %v1624
    %v1626 = vpop.f32.mrb[0].mxu0
    %v1627 = vpop.f32.mrb[0].mxu0
    %v1628 = vadd.f32 %v1439, %v1627
    %v1629 = vpop.f32.mrb[0].mxu0
    %1630 = vmatprep.mubr.bf16.mxu0 0
    %1631 = vmatmul.mubr.bf16.gmra.mrb[0].mxu0 %v1473
    %v1632 = vpop.f32.mrb[0].mxu0
    %v1633 = vadd.f32 %v1439, %v1632
    %v1634 = vpop.f32.mrb[0].mxu0
    %v1635 = vpop.f32.mrb[0].mxu0
    %v1636 = vadd.f32 %v1439, %v1635
    %v1637 = vpop.f32.mrb[0].mxu0
    %1638 = vmatprep.mubr.bf16.mxu0 0
    %1639 = vmatmul.mubr.bf16.gmra.mrb[0].mxu0 %v1476
    %v1640 = vpop.f32.mrb[0].mxu0
    %v1641 = vadd.f32 %v1439, %v1640
    %v1642 = vpop.f32.mrb[0].mxu0
    %v1643 = vpop.f32.mrb[0].mxu0
    %v1644 = vadd.f32 %v1439, %v1643
    %v1645 = vpop.f32.mrb[0].mxu0
    %1646 = vmatprep.mubr.bf16.mxu0 0
    %1647 = vmatmul.mubr.bf16.gmra.mrb[0].mxu0 %v1479
    %v1648 = vpop.f32.mrb[0].mxu0
    %v1649 = vadd.f32 %v1439, %v1648
    %v1650 = vpop.f32.mrb[0].mxu0
    %v1651 = vpop.f32.mrb[0].mxu0
    %v1652 = vadd.f32 %v1439, %v1651
    %v1653 = vpop.f32.mrb[0].mxu0
    %1654 = vmatprep.mubr.bf16.mxu0 0
    %1655 = vmatmul.mubr.bf16.gmra.mrb[0].mxu0 %v1482
    %v1656 = vpop.f32.mrb[0].mxu0
    %v1657 = vadd.f32 %v1439, %v1656
    %v1658 = vpop.f32.mrb[0].mxu0
    %v1659 = vpop.f32.mrb[0].mxu0
    %v1660 = vadd.f32 %v1439, %v1659
    %v1661 = vpop.f32.mrb[0].mxu0
    %1662 = vmatprep.mubr.bf16.mxu0 0
    %1663 = vmatmul.mubr.bf16.gmra.mrb[0].mxu0 %v1485
    %v1664 = vpop.f32.mrb[0].mxu0
    %v1665 = vadd.f32 %v1439, %v1664
    %v1666 = vpop.f32.mrb[0].mxu0
    %v1667 = vpop.f32.mrb[0].mxu0
    %v1668 = vadd.f32 %v1439, %v1667
    %v1669 = vpop.f32.mrb[0].mxu0
    %1670 = vmatprep.mubr.bf16.mxu0 0
    %1671 = vmatmul.mubr.bf16.gmra.mrb[0].mxu0 %v1488
    %v1672 = vpop.f32.mrb[0].mxu0
    %v1673 = vadd.f32 %v1439, %v1672
    %v1674 = vpop.f32.mrb[0].mxu0
    %v1675 = vpop.f32.mrb[0].mxu0
    %v1676 = vadd.f32 %v1439, %v1675
    %v1677 = vpop.f32.mrb[0].mxu0
    %1678 = vmatprep.mubr.bf16.mxu0 0
    %1679 = vmatmul.mubr.bf16.gmra.mrb[0].mxu0 %v1491
    %v1680 = vpop.f32.mrb[0].mxu0
    %v1681 = vadd.f32 %v1439, %v1680
    %v1682 = vpop.f32.mrb[0].mxu0
    %v1683 = vpop.f32.mrb[0].mxu0
    %v1684 = vadd.f32 %v1439, %v1683
    %v1685 = vpop.f32.mrb[0].mxu0
    %1686 = vmatprep.mubr.bf16.mxu0 0
    %1687 = vmatmul.mubr.bf16.gmra.mrb[0].mxu0 %v1494
    %v1688 = vpop.f32.mrb[0].mxu0
    %v1689 = vadd.f32 %v1439, %v1688
    %v1690 = vpop.f32.mrb[0].mxu0
    %v1691 = vpop.f32.mrb[0].mxu0
    %v1692 = vadd.f32 %v1439, %v1691
    %v1693 = vpop.f32.mrb[0].mxu0
    %1694 = vmatprep.mubr.bf16.mxu0 0
    %1695 = vmatmul.mubr.bf16.gmra.mrb[0].mxu0 %v1497
    %v1696 = vpop.f32.mrb[0].mxu0
    %v1697 = vadd.f32 %v1439, %v1696
    %v1698 = vpop.f32.mrb[0].mxu0
    %v1699 = vpop.f32.mrb[0].mxu0
    %v1700 = vadd.f32 %v1439, %v1699
    %v1701 = vpop.f32.mrb[0].mxu0
    %1702 = vmatprep.mubr.bf16.mxu0 0
    %1703 = vmatmul.mubr.bf16.gmra.mrb[0].mxu0 %v1500
    %v1704 = vpop.f32.mrb[0].mxu0
    %v1705 = vadd.f32 %v1439, %v1704
    %v1706 = vpop.f32.mrb[0].mxu0
    %v1707 = vpop.f32.mrb[0].mxu0
    %v1708 = vadd.f32 %v1439, %v1707
    %v1709 = vpop.f32.mrb[0].mxu0
    %1710 = vmatprep.mubr.bf16.mxu0 0
    %1711 = vmatmul.mubr.bf16.gmra.mrb[0].mxu0 %v1503
    %v1712 = vpop.f32.mrb[0].mxu0
    %v1713 = vadd.f32 %v1439, %v1712
    %v1714 = vpop.f32.mrb[0].mxu0
    %v1715 = vpop.f32.mrb[0].mxu0
    %v1716 = vadd.f32 %v1439, %v1715
    %v1717 = vpop.f32.mrb[0].mxu0
    %1718 = vmatprep.mubr.bf16.mxu0 0
    %1719 = vmatmul.mubr.bf16.gmra.mrb[0].mxu0 %v1506
    %v1720 = vpop.f32.mrb[0].mxu0
    %v1721 = vadd.f32 %v1439, %v1720
    %v1722 = vpop.f32.mrb[0].mxu0
    %v1723 = vpop.f32.mrb[0].mxu0
    %v1724 = vadd.f32 %v1439, %v1723
    %v1725 = vpop.f32.mrb[0].mxu0
    %1726 = vmatprep.mubr.bf16.mxu0 0
    %1727 = vmatmul.mubr.bf16.gmra.mrb[0].mxu0 %v1509
    %v1728 = vpop.f32.mrb[0].mxu0
    %v1729 = vadd.f32 %v1439, %v1728
    %v1730 = vpop.f32.mrb[0].mxu0
    %v1731 = vpop.f32.mrb[0].mxu0
    %v1732 = vadd.f32 %v1439, %v1731
    %v1733 = vpop.f32.mrb[0].mxu0
    %1734 = vmatprep.mubr.bf16.mxu0 0
    %1735 = vmatmul.mubr.bf16.gmra.mrb[0].mxu0 %v1512
    %v1736 = vpop.f32.mrb[0].mxu0
    %v1737 = vadd.f32 %v1439, %v1736
    %v1738 = vpop.f32.mrb[0].mxu0
    %v1739 = vpop.f32.mrb[0].mxu0
    %v1740 = vadd.f32 %v1439, %v1739
    %v1741 = vpop.f32.mrb[0].mxu0
    %1742 = vmatprep.mubr.bf16.mxu0 0
    %1743 = vmatmul.mubr.bf16.gmra.mrb[0].mxu0 %v1515
    %v1744 = vpop.f32.mrb[0].mxu0
    %v1745 = vadd.f32 %v1439, %v1744
    %v1746 = vpop.f32.mrb[0].mxu0
    %v1747 = vpop.f32.mrb[0].mxu0
    %v1748 = vadd.f32 %v1439, %v1747
    %v1749 = vpop.f32.mrb[0].mxu0
    %1750 = vmatprep.mubr.bf16.mxu0 0
    %1751 = vmatmul.mubr.bf16.gmra.mrb[0].mxu0 %v1518
    %v1752 = vpop.f32.mrb[0].mxu0
    %v1753 = vadd.f32 %v1439, %v1752
    %v1754 = vpop.f32.mrb[0].mxu0
    %v1755 = vpop.f32.mrb[0].mxu0
    %v1756 = vadd.f32 %v1439, %v1755
    %v1757 = vpop.f32.mrb[0].mxu0
    %1758 = vmatprep.mubr.bf16.mxu0 0
    %1759 = vmatmul.mubr.bf16.gmra.mrb[0].mxu0 %v1521
    %v1760 = vpop.f32.mrb[0].mxu0
    %v1761 = vadd.f32 %v1439, %v1760
    %v1762 = vpop.f32.mrb[0].mxu0
    %v1763 = vpop.f32.mrb[0].mxu0
    %v1764 = vadd.f32 %v1439, %v1763
    %v1765 = vpop.f32.mrb[0].mxu0
    %1766 = vmatprep.mubr.bf16.mxu0 0
    %1767 = vmatmul.mubr.bf16.gmra.mrb[0].mxu0 %v1524
    %v1768 = vpop.f32.mrb[0].mxu0
    %v1769 = vadd.f32 %v1439, %v1768
    %v1770 = vpop.f32.mrb[0].mxu0
    %v1771 = vpop.f32.mrb[0].mxu0
    %v1772 = vadd.f32 %v1439, %v1771
    %v1773 = vpop.f32.mrb[0].mxu0
    %1774 = vmatprep.mubr.bf16.mxu0 0
    %1775 = vmatmul.mubr.bf16.gmra.mrb[0].mxu0 %v1527
    %v1776 = vpop.f32.mrb[0].mxu0
    %v1777 = vadd.f32 %v1439, %v1776
    %v1778 = vpop.f32.mrb[0].mxu0
    %v1779 = vpop.f32.mrb[0].mxu0
    %v1780 = vadd.f32 %v1439, %v1779
    %v1781 = vpop.f32.mrb[0].mxu0
    %1782 = vmatprep.mubr.bf16.mxu0 0
    %1783 = vmatmul.mubr.bf16.gmra.mrb[0].mxu0 %v1530
    %v1784 = vpop.f32.mrb[0].mxu0
    %v1785 = vadd.f32 %v1439, %v1784
    %v1786 = vpop.f32.mrb[0].mxu0
    %v1787 = vpop.f32.mrb[0].mxu0
    %v1788 = vadd.f32 %v1439, %v1787
    %v1789 = vpop.f32.mrb[0].mxu0
    %1790 = vmatprep.mubr.bf16.mxu0 0
    %1791 = vmatmul.mubr.bf16.gmra.mrb[0].mxu0 %v1533
    %v1792 = vpop.f32.mrb[0].mxu0
    %v1793 = vadd.f32 %v1439, %v1792
    %v1794 = vpop.f32.mrb[0].mxu0
    %v1795 = vpop.f32.mrb[0].mxu0
    %v1796 = vadd.f32 %v1439, %v1795
    %v1797 = vpop.f32.mrb[0].mxu0
    %1798 = vmatprep.mubr.bf16.mxu0 0
    %1799 = vmatmul.mubr.bf16.gmra.mrb[0].mxu0 %v1536
    %v1800 = vpop.f32.mrb[0].mxu0
    %v1801 = vadd.f32 %v1439, %v1800
    %v1802 = vpop.f32.mrb[0].mxu0
    %v1803 = vpop.f32.mrb[0].mxu0
    %v1804 = vadd.f32 %v1439, %v1803
    %v1805 = vpop.f32.mrb[0].mxu0
    %1806 = vmatprep.mubr.bf16.mxu0 0
    %1807 = vmatmul.mubr.bf16.gmra.mrb[0].mxu0 %v1539
    %v1808 = vpop.f32.mrb[0].mxu0
    %v1809 = vadd.f32 %v1439, %v1808
    %v1810 = vpop.f32.mrb[0].mxu0
    %v1811 = vpop.f32.mrb[0].mxu0
    %v1812 = vadd.f32 %v1439, %v1811
    %v1813 = vpop.f32.mrb[0].mxu0
    %1814 = vmatprep.mubr.bf16.mxu0 0
    %1815 = vmatmul.mubr.bf16.gmra.mrb[0].mxu0 %v1542
    %v1816 = vpop.f32.mrb[0].mxu0
    %v1817 = vadd.f32 %v1439, %v1816
    %v1818 = vpop.f32.mrb[0].mxu0
    %v1819 = vpop.f32.mrb[0].mxu0
    %v1820 = vadd.f32 %v1439, %v1819
    %v1821 = vpop.f32.mrb[0].mxu0
    %1822 = vmatprep.mubr.bf16.mxu0 0
    %1823 = vmatmul.mubr.bf16.gmra.mrb[0].mxu0 %v1545
    %v1824 = vpop.f32.mrb[0].mxu0
    %v1825 = vadd.f32 %v1439, %v1824
    %v1826 = vpop.f32.mrb[0].mxu0
    %v1827 = vpop.f32.mrb[0].mxu0
    %v1828 = vadd.f32 %v1439, %v1827
    %v1829 = vpop.f32.mrb[0].mxu0
    %1830 = vmatprep.mubr.bf16.mxu0 0
    %1831 = vmatmul.mubr.bf16.gmra.mrb[0].mxu0 %v1548
    %v1832 = vpop.f32.mrb[0].mxu0
    %v1833 = vadd.f32 %v1439, %v1832
    %v1834 = vpop.f32.mrb[0].mxu0
    %v1835 = vpop.f32.mrb[0].mxu0
    %v1836 = vadd.f32 %v1439, %v1835
    %v1837 = vpop.f32.mrb[0].mxu0
    %1838 = vdwg.mxu0
    %v1839 = vmax.f32 %v1585, 0.0
    %v1840 = vmax.f32 %v1588, 0.0
    %v1841 = vmax.f32 %v1593, 0.0
    %v1842 = vmax.f32 %v1596, 0.0
    %v1843 = vmax.f32 %v1601, 0.0
    %v1844 = vmax.f32 %v1604, 0.0
    %v1845 = vmax.f32 %v1609, 0.0
    %v1846 = vmax.f32 %v1612, 0.0
    %v1847 = vmax.f32 %v1617, 0.0
    %v1848 = vmax.f32 %v1620, 0.0
    %v1849 = vmax.f32 %v1625, 0.0
    %v1850 = vmax.f32 %v1628, 0.0
    %v1851 = vmax.f32 %v1633, 0.0
    %v1852 = vmax.f32 %v1636, 0.0
    %v1853 = vmax.f32 %v1641, 0.0
    %v1854 = vmax.f32 %v1644, 0.0
    %v1855 = vmax.f32 %v1649, 0.0
    %v1856 = vmax.f32 %v1652, 0.0
    %v1857 = vmax.f32 %v1657, 0.0
    %v1858 = vmax.f32 %v1660, 0.0
    %v1859 = vmax.f32 %v1665, 0.0
    %v1860 = vmax.f32 %v1668, 0.0
    %v1861 = vmax.f32 %v1673, 0.0
    %v1862 = vmax.f32 %v1676, 0.0
    %v1863 = vmax.f32 %v1681, 0.0
    %v1864 = vmax.f32 %v1684, 0.0
    %v1865 = vmax.f32 %v1689, 0.0
    %v1866 = vmax.f32 %v1692, 0.0
    %v1867 = vmax.f32 %v1697, 0.0
    %v1868 = vmax.f32 %v1700, 0.0
    %v1869 = vmax.f32 %v1705, 0.0
    %v1870 = vmax.f32 %v1708, 0.0
    %v1871 = vmax.f32 %v1713, 0.0
    %v1872 = vmax.f32 %v1716, 0.0
    %v1873 = vmax.f32 %v1721, 0.0
    %v1874 = vmax.f32 %v1724, 0.0
    %v1875 = vmax.f32 %v1729, 0.0
    %v1876 = vmax.f32 %v1732, 0.0
    %v1877 = vmax.f32 %v1737, 0.0
    %v1878 = vmax.f32 %v1740, 0.0
    %v1879 = vmax.f32 %v1745, 0.0
    %v1880 = vmax.f32 %v1748, 0.0
    %v1881 = vmax.f32 %v1753, 0.0
    %v1882 = vmax.f32 %v1756, 0.0
    %v1883 = vmax.f32 %v1761, 0.0
    %v1884 = vmax.f32 %v1764, 0.0
    %v1885 = vmax.f32 %v1769, 0.0
    %v1886 = vmax.f32 %v1772, 0.0
    %v1887 = vmax.f32 %v1777, 0.0
    %v1888 = vmax.f32 %v1780, 0.0
    %v1889 = vmax.f32 %v1785, 0.0
    %v1890 = vmax.f32 %v1788, 0.0
    %v1891 = vmax.f32 %v1793, 0.0
    %v1892 = vmax.f32 %v1796, 0.0
    %v1893 = vmax.f32 %v1801, 0.0
    %v1894 = vmax.f32 %v1804, 0.0
    %v1895 = vmax.f32 %v1809, 0.0
    %v1896 = vmax.f32 %v1812, 0.0
    %v1897 = vmax.f32 %v1817, 0.0
    %v1898 = vmax.f32 %v1820, 0.0
    %v1899 = vmax.f32 %v1825, 0.0
    %v1900 = vmax.f32 %v1828, 0.0
    %v1901 = vmax.f32 %v1833, 0.0
    %v1902 = vmax.f32 %v1836, 0.0
    %v1903 = vld [vmem:[%s7] sm:$0x1]
    %v1904 = vld [vmem:[#allocation2] sm:$0x1]
    %1906 = vset.pattern.permute.xlu0 0
    %1907 = vperm.xlu0 %1906, %v1904
    %v1908 = vpop.permute.xlu0 %1907
    %v1910 = vlaneseq
    %v1911 = vshrl.u32 %v1910, 7
    %v1912 = vsub.s32 0, %v1911
    %v1913 = vrot.slane %v1908, %v1912
    %vm1914 = vcmask 523264
    %v1916 = vsel %vm1914, %v1903, 0
    %v1919 = vsel %vm1914, %v1839, 0
    %v1922 = vsel %vm1914, %v1840, 0
    %v1925 = vsel %vm1914, %v1841, 0
    %v1928 = vsel %vm1914, %v1842, 0
    %v1931 = vsel %vm1914, %v1843, 0
    %v1934 = vsel %vm1914, %v1844, 0
    %v1937 = vsel %vm1914, %v1845, 0
    %v1940 = vsel %vm1914, %v1846, 0
    %v1943 = vsel %vm1914, %v1847, 0
    %v1946 = vsel %vm1914, %v1848, 0
    %v1949 = vsel %vm1914, %v1849, 0
    %v1952 = vsel %vm1914, %v1850, 0
    %v1955 = vsel %vm1914, %v1851, 0
    %v1958 = vsel %vm1914, %v1852, 0
    %v1961 = vsel %vm1914, %v1853, 0
    %v1964 = vsel %vm1914, %v1854, 0
    %v1967 = vsel %vm1914, %v1855, 0
    %v1970 = vsel %vm1914, %v1856, 0
    %v1973 = vsel %vm1914, %v1857, 0
    %v1976 = vsel %vm1914, %v1858, 0
    %v1979 = vsel %vm1914, %v1859, 0
    %v1982 = vsel %vm1914, %v1860, 0
    %v1985 = vsel %vm1914, %v1861, 0
    %v1988 = vsel %vm1914, %v1862, 0
    %v1991 = vsel %vm1914, %v1863, 0
    %v1994 = vsel %vm1914, %v1864, 0
    %v1997 = vsel %vm1914, %v1865, 0
    %v2000 = vsel %vm1914, %v1866, 0
    %v2003 = vsel %vm1914, %v1867, 0
    %v2006 = vsel %vm1914, %v1868, 0
    %v2009 = vsel %vm1914, %v1869, 0
    %v2012 = vsel %vm1914, %v1870, 0
    %v2015 = vsel %vm1914, %v1871, 0
    %v2018 = vsel %vm1914, %v1872, 0
    %v2021 = vsel %vm1914, %v1873, 0
    %v2024 = vsel %vm1914, %v1874, 0
    %v2027 = vsel %vm1914, %v1875, 0
    %v2030 = vsel %vm1914, %v1876, 0
    %v2033 = vsel %vm1914, %v1877, 0
    %v2036 = vsel %vm1914, %v1878, 0
    %v2039 = vsel %vm1914, %v1879, 0
    %v2042 = vsel %vm1914, %v1880, 0
    %v2045 = vsel %vm1914, %v1881, 0
    %v2048 = vsel %vm1914, %v1882, 0
    %v2051 = vsel %vm1914, %v1883, 0
    %v2054 = vsel %vm1914, %v1884, 0
    %v2057 = vsel %vm1914, %v1885, 0
    %v2060 = vsel %vm1914, %v1886, 0
    %v2063 = vsel %vm1914, %v1887, 0
    %v2066 = vsel %vm1914, %v1888, 0
    %v2069 = vsel %vm1914, %v1889, 0
    %v2072 = vsel %vm1914, %v1890, 0
    %v2075 = vsel %vm1914, %v1891, 0
    %v2078 = vsel %vm1914, %v1892, 0
    %v2081 = vsel %vm1914, %v1893, 0
    %v2084 = vsel %vm1914, %v1894, 0
    %v2087 = vsel %vm1914, %v1895, 0
    %v2090 = vsel %vm1914, %v1896, 0
    %v2093 = vsel %vm1914, %v1897, 0
    %v2096 = vsel %vm1914, %v1898, 0
    %v2099 = vsel %vm1914, %v1899, 0
    %v2102 = vsel %vm1914, %v1900, 0
    %v2105 = vsel %vm1914, %v1901, 0
    %v2108 = vsel %vm1914, %v1902, 0
    %2110 = vmatprep.subr.mxu0 0.0
    %2111 = vmatpush1.xpose.msra.mxu0 %v1919
    %2112 = vmatprep.subr.mxu0 0.0
    %2113 = vmatpush1.xpose.msra.mxu0 %v1922
    %2114 = vmatprep.subr.mxu0 0.0
    %2115 = vmatpush1.xpose.msra.mxu0 %v1925
    %2116 = vmatprep.subr.mxu0 0.0
    %2117 = vmatpush1.xpose.msra.mxu0 %v1928
    %2118 = vmatprep.subr.mxu0 0.0
    %2119 = vmatpush1.xpose.msra.mxu0 %v1931
    %2120 = vmatprep.subr.mxu0 0.0
    %2121 = vmatpush1.xpose.msra.mxu0 %v1934
    %2122 = vmatprep.subr.mxu0 0.0
    %2123 = vmatpush1.xpose.msra.mxu0 %v1937
    %2124 = vmatprep.subr.mxu0 0.0
    %2125 = vmatpush1.xpose.msra.mxu0 %v1940
    %2126 = vmatprep.subr.mxu0 0.0
    %2127 = vmatpush1.xpose.msra.mxu0 %v1943
    %2128 = vmatprep.subr.mxu0 0.0
    %2129 = vmatpush1.xpose.msra.mxu0 %v1946
    %2130 = vmatprep.subr.mxu0 0.0
    %2131 = vmatpush1.xpose.msra.mxu0 %v1949
    %2132 = vmatprep.subr.mxu0 0.0
    %2133 = vmatpush1.xpose.msra.mxu0 %v1952
    %2134 = vmatprep.subr.mxu0 0.0
    %2135 = vmatpush1.xpose.msra.mxu0 %v1955
    %2136 = vmatprep.subr.mxu0 0.0
    %2137 = vmatpush1.xpose.msra.mxu0 %v1958
    %2138 = vmatprep.subr.mxu0 0.0
    %2139 = vmatpush1.xpose.msra.mxu0 %v1961
    %2140 = vmatprep.subr.mxu0 0.0
    %2141 = vmatpush1.xpose.msra.mxu0 %v1964
    %2142 = vmatprep.subr.mxu0 0.0
    %2143 = vmatpush1.xpose.msra.mxu0 %v1967
    %2144 = vmatprep.subr.mxu0 0.0
    %2145 = vmatpush1.xpose.msra.mxu0 %v1970
    %2146 = vmatprep.subr.mxu0 0.0
    %2147 = vmatpush1.xpose.msra.mxu0 %v1973
    %2148 = vmatprep.subr.mxu0 0.0
    %2149 = vmatpush1.xpose.msra.mxu0 %v1976
    %2150 = vmatprep.subr.mxu0 0.0
    %2151 = vmatpush1.xpose.msra.mxu0 %v1979
    %2152 = vmatprep.subr.mxu0 0.0
    %2153 = vmatpush1.xpose.msra.mxu0 %v1982
    %2154 = vmatprep.subr.mxu0 0.0
    %2155 = vmatpush1.xpose.msra.mxu0 %v1985
    %2156 = vmatprep.subr.mxu0 0.0
    %2157 = vmatpush1.xpose.msra.mxu0 %v1988
    %2158 = vmatprep.subr.mxu0 0.0
    %2159 = vmatpush1.xpose.msra.mxu0 %v1991
    %2160 = vmatprep.subr.mxu0 0.0
    %2161 = vmatpush1.xpose.msra.mxu0 %v1994
    %2162 = vmatprep.subr.mxu0 0.0
    %2163 = vmatpush1.xpose.msra.mxu0 %v1997
    %2164 = vmatprep.subr.mxu0 0.0
    %2165 = vmatpush1.xpose.msra.mxu0 %v2000
    %2166 = vmatprep.subr.mxu0 0.0
    %2167 = vmatpush1.xpose.msra.mxu0 %v2003
    %2168 = vmatprep.subr.mxu0 0.0
    %2169 = vmatpush1.xpose.msra.mxu0 %v2006
    %2170 = vmatprep.subr.mxu0 0.0
    %2171 = vmatpush1.xpose.msra.mxu0 %v2009
    %2172 = vmatprep.subr.mxu0 0.0
    %2173 = vmatpush1.xpose.msra.mxu0 %v2012
    %2174 = vmatprep.mubr.f32.mxu0 0.0
    %2175 = vmatmul.mubr.f32.gmra.mrb[0].mxu0 %v1916
    %v2176 = vpop.f32.mrb[0].mxu0
    %v2177 = vadd.f32 %v1913, %v2176
    %v2178 = vpop.f32.mrb[0].mxu0
    %v2179 = vadd.f32 %v1913, %v2178
    %2180 = vdwg.mxu0
    %2181 = vmatprep.subr.mxu0 0.0
    %2182 = vmatpush1.xpose.msra.mxu0 %v2015
    %2183 = vmatprep.subr.mxu0 0.0
    %2184 = vmatpush1.xpose.msra.mxu0 %v2018
    %2185 = vmatprep.subr.mxu0 0.0
    %2186 = vmatpush1.xpose.msra.mxu0 %v2021
    %2187 = vmatprep.subr.mxu0 0.0
    %2188 = vmatpush1.xpose.msra.mxu0 %v2024
    %2189 = vmatprep.subr.mxu0 0.0
    %2190 = vmatpush1.xpose.msra.mxu0 %v2027
    %2191 = vmatprep.subr.mxu0 0.0
    %2192 = vmatpush1.xpose.msra.mxu0 %v2030
    %2193 = vmatprep.subr.mxu0 0.0
    %2194 = vmatpush1.xpose.msra.mxu0 %v2033
    %2195 = vmatprep.subr.mxu0 0.0
    %2196 = vmatpush1.xpose.msra.mxu0 %v2036
    %2197 = vmatprep.subr.mxu0 0.0
    %2198 = vmatpush1.xpose.msra.mxu0 %v2039
    %2199 = vmatprep.subr.mxu0 0.0
    %2200 = vmatpush1.xpose.msra.mxu0 %v2042
    %2201 = vmatprep.subr.mxu0 0.0
    %2202 = vmatpush1.xpose.msra.mxu0 %v2045
    %2203 = vmatprep.subr.mxu0 0.0
    %2204 = vmatpush1.xpose.msra.mxu0 %v2048
    %2205 = vmatprep.subr.mxu0 0.0
    %2206 = vmatpush1.xpose.msra.mxu0 %v2051
    %2207 = vmatprep.subr.mxu0 0.0
    %2208 = vmatpush1.xpose.msra.mxu0 %v2054
    %2209 = vmatprep.subr.mxu0 0.0
    %2210 = vmatpush1.xpose.msra.mxu0 %v2057
    %2211 = vmatprep.subr.mxu0 0.0
    %2212 = vmatpush1.xpose.msra.mxu0 %v2060
    %2213 = vmatprep.subr.mxu0 0.0
    %2214 = vmatpush1.xpose.msra.mxu0 %v2063
    %2215 = vmatprep.subr.mxu0 0.0
    %2216 = vmatpush1.xpose.msra.mxu0 %v2066
    %2217 = vmatprep.subr.mxu0 0.0
    %2218 = vmatpush1.xpose.msra.mxu0 %v2069
    %2219 = vmatprep.subr.mxu0 0.0
    %2220 = vmatpush1.xpose.msra.mxu0 %v2072
    %2221 = vmatprep.subr.mxu0 0.0
    %2222 = vmatpush1.xpose.msra.mxu0 %v2075
    %2223 = vmatprep.subr.mxu0 0.0
    %2224 = vmatpush1.xpose.msra.mxu0 %v2078
    %2225 = vmatprep.subr.mxu0 0.0
    %2226 = vmatpush1.xpose.msra.mxu0 %v2081
    %2227 = vmatprep.subr.mxu0 0.0
    %2228 = vmatpush1.xpose.msra.mxu0 %v2084
    %2229 = vmatprep.subr.mxu0 0.0
    %2230 = vmatpush1.xpose.msra.mxu0 %v2087
    %2231 = vmatprep.subr.mxu0 0.0
    %2232 = vmatpush1.xpose.msra.mxu0 %v2090
    %2233 = vmatprep.subr.mxu0 0.0
    %2234 = vmatpush1.xpose.msra.mxu0 %v2093
    %2235 = vmatprep.subr.mxu0 0.0
    %2236 = vmatpush1.xpose.msra.mxu0 %v2096
    %2237 = vmatprep.subr.mxu0 0.0
    %2238 = vmatpush1.xpose.msra.mxu0 %v2099
    %2239 = vmatprep.subr.mxu0 0.0
    %2240 = vmatpush1.xpose.msra.mxu0 %v2102
    %2241 = vmatprep.subr.mxu0 0.0
    %2242 = vmatpush1.xpose.msra.mxu0 %v2105
    %2243 = vmatprep.subr.mxu0 0.0
    %2244 = vmatpush1.xpose.msra.mxu0 %v2108
    %2245 = vmatprep.mubr.f32.mxu0 0.0
    %2246 = vmatmul.mubr.f32.gmra.mrb[0].mxu0 %v1916
    %v2247 = vpop.f32.mrb[0].mxu0
    %v2248 = vadd.f32 %v1913, %v2247
    %v2249 = vpop.f32.mrb[0].mxu0
    %v2250 = vadd.f32 %v1913, %v2249
    %2251 = vdwg.mxu0
    %v2252 = vsub.f32 0.0, %v2177
    %v2253 = vsub.f32 0.0, %v2179
    %v2254 = vsub.f32 0.0, %v2248
    %v2255 = vsub.f32 0.0, %v2250
    %v2256 = vmul.f32 %v2252, 1.442695
    %v2257 = vpow.pop %v2256
    %v2258 = vmul.f32 %v2253, 1.442695
    %v2259 = vpow.pop %v2258
    %v2260 = vmul.f32 %v2254, 1.442695
    %v2261 = vpow.pop %v2260
    %v2262 = vmul.f32 %v2255, 1.442695
    %v2263 = vpow.pop %v2262
    %v2264 = vadd.f32 %v2257, 1.0
    %v2265 = vadd.f32 %v2259, 1.0
    %v2266 = vadd.f32 %v2261, 1.0
    %v2267 = vadd.f32 %v2263, 1.0
    %v2268 = vrcp.pop %v2264
    %v2269 = vrcp.pop %v2265
    %v2270 = vrcp.pop %v2266
    %v2271 = vrcp.pop %v2267
    %v2276 = vcombine.low %v2268, %v2269
    %v2277 = vcombine.low %v2270, %v2271
    %v2279 = vunpack.c.l.s4 1966171168
    %v2280 = vunpack.c.0.s8 %v2279
    %v2281 = vlaneseq
    %v2282 = vshrl.u32 %v2281, 7
    %v2283 = vsub.s32 %v2280, %v2282
    %v2284 = vrot.slane %v2276, %v2283
    %v2286 = vunpack.c.l.s4 1966171168
    %v2287 = vunpack.c.0.s8 %v2286
    %v2288 = vlaneseq
    %v2289 = vshrl.u32 %v2288, 7
    %v2290 = vsub.s32 %v2287, %v2289
    %v2291 = vrot.slane %v2277, %v2290
    %v2292 = vcombine.low %v2284, %v2291
    %v2294 = vunpack.c.l.s4 1966171168
    %v2295 = vunpack.c.0.s8 %v2294
    %v2296 = vlaneseq
    %v2297 = vshrl.u32 %v2296, 7
    %v2298 = vsub.s32 %v2295, %v2297
    %v2299 = vrot.slane %v2292, %v2298
    %v2301 = vlaneseq
    %vm2302 = vcmp.ge.s32.totalorder %v2301, 0
    %vm2303 = vcmp.lt.s32.totalorder %v2301, 512
    %vm2304 = vmand %vm2302, %vm2303
    %2305 = vst.msk [vmem:[#allocation3] sm:$0xf] %vm2304, %v2299
    // Predicated region
    $region38: #{tpu_custom_call.1} parent=1 // pred_check
      _
    $region39: #{tpu_custom_call.1} parent=1 // pred_check_branch
      %2307 = sbr.rel (0) target = $region41
    $region40: #{tpu_custom_call.1} parent=1 // pred_region
      %s2309 = ssub.s32 64, 64
      %2310 = vsyncadd [#allocation4], %s2309
      %s2312 = sshll.u32 [#allocation3], 4
      %s2313 = int_to_ptr.vmem [resolvable:$true] %s2312
      %2315 = dma.vmem_to_hbm [thread:$0]  %s2313, 64, %s9, [#allocation4]
    $region41: #{tpu_custom_call.1} parent=1 // pred_fallthru
      _
    // Predicated region
    $region42: #{tpu_custom_call.1} parent=1 // pred_check
      _
    $region43: #{tpu_custom_call.1} parent=1 // pred_check_branch
      %2317 = sbr.rel (0) target = $region45
    $region44: #{tpu_custom_call.1} parent=1 // pred_region
      %2318 = dma.done [#allocation4], 64
    $region45: #{tpu_custom_call.1} parent=1 // pred_fallthru
      _
    %2319 = vsyncpa [#allocation4], 1

</llo_original>
